<compile_context>
chip_gen: v6e
topology: v6e:2x2x1
jax: 0.10.0
libtpu: 0.0.40
codegen_flags: <defaults>
</compile_context>

<pallas_src>
import math

import jax
import jax.numpy as jnp
from jax import lax
from jax.experimental import pallas as pl
from jax.experimental.pallas import tpu as pltpu


def _round_up(n, m):
    return ((n + m - 1) // m) * m


def _biquad_block_kernel(x_ref, gt_ref, c_ref, o_ref, xc_ref, yc_ref):
    """One (R_tile, U) tile of the block-recursive biquad.

    x_ref : (R_tile, U) f32 input tile (sublanes = independent rows, lanes = time)
    gt_ref: (U, U)     f32, Gt[k, t] = G[t - k]  (causal biquad impulse response)
    c_ref : (4, U)     f32 boundary weights for [x[-1], x[-2], y[-1], y[-2]]
    o_ref : (R_tile, U) f32 output tile (clamped to [-1, 1])
    xc_ref: (R_tile, 2) f32 scratch carry [x[-2], x[-1]] from the previous time tile
    yc_ref: (R_tile, 2) f32 scratch carry [y[-2], y[-1]] (UNclamped, as in lfilter)
    """
    t_idx = pl.program_id(1)

    # Zero initial conditions at the start of each row-block's time sweep.
    @pl.when(t_idx == 0)
    def _():
        xc_ref[...] = jnp.zeros_like(xc_ref)
        yc_ref[...] = jnp.zeros_like(yc_ref)

    xt = x_ref[...]                                    # (R_tile, U)
    u = xt.shape[1]

    # Whole within-block recursion as a single MXU matmul (f32-accurate passes).
    y = jnp.dot(xt, gt_ref[...],
                preferred_element_type=jnp.float32,
                precision=lax.Precision.HIGHEST)

    # Boundary (carry) contributions: rank-1 outer-product broadcasts on the VPU.
    y = (y
         + xc_ref[:, 1:2] * c_ref[0:1, :]              # x[-1]
         + xc_ref[:, 0:1] * c_ref[1:2, :]              # x[-2]
         + yc_ref[:, 1:2] * c_ref[2:3, :]              # y[-1]
         + yc_ref[:, 0:1] * c_ref[3:4, :])             # y[-2]

    # Update carries for the next time tile (feedback uses the UNclamped y).
    xc_ref[...] = xt[:, u - 2:]
    yc_ref[...] = y[:, u - 2:]

    o_ref[...] = jnp.clip(y, -1.0, 1.0)


def biquad_eq_forward(x, t, params, sample_rate):
    """JAX/Pallas equivalent of BiquadEq.forward(x, t). `t` is unused (as in torch)."""
    del t
    x = jnp.asarray(x)
    dtype_in = x.dtype
    orig_shape = x.shape
    T = orig_shape[-1]

    # --- torchaudio.functional.equalizer_biquad coefficient math ----------------
    center_freq = params["center_freq"][0].astype(jnp.float32)
    gain_db = params["q"][0].astype(jnp.float32)                      # 'gain' arg
    Q = jnp.clip(params["gain"], 0.1, 10.0)[0].astype(jnp.float32)    # 'Q' arg

    w0 = 2.0 * math.pi * center_freq / sample_rate
    A = jnp.exp(gain_db / 40.0 * math.log(10.0))
    alpha = jnp.sin(w0) / 2.0 / Q

    b0 = 1.0 + alpha * A
    b1 = -2.0 * jnp.cos(w0)
    b2 = 1.0 - alpha * A
    a0 = 1.0 + alpha / A
    a1 = -2.0 * jnp.cos(w0)
    a2 = 1.0 - alpha / A
    b0n, b1n, b2n = b0 / a0, b1 / a0, b2 / a0
    a1n, a2n = a1 / a0, a2 / a0

    # --- tile sizes (small, fit comfortably in v5e 16 MiB scoped VMEM) ----------
    U = min(256, _round_up(T, 128))          # time block (lane axis), mult of 128
    T_pad = _round_up(T, U)
    R0 = 1
    for d in orig_shape[:-1]:
        R0 *= d
    R0 = max(R0, 1)
    R_tile = min(_round_up(R0, 8), 256)      # row block (sublane axis), mult of 8
    R_pad = _round_up(R0, R_tile)

    # --- block-recursion operators (built once on host, O(U) scan) --------------
    # h[n]: impulse response of the pure feedback 1 / (1 + a1 z^-1 + a2 z^-2)
    def _h_step(carry, _):
        h1_, h2_ = carry
        hn = -a1n * h1_ - a2n * h2_
        return (hn, h1_), hn

    h_0 = jnp.ones((), jnp.float32)
    h_1 = -a1n
    _, h_rest = lax.scan(_h_step, (h_1, h_0), None, length=U - 1)     # h[2..U]
    h = jnp.concatenate([jnp.stack([h_0, h_1]), h_rest])              # (U + 1,)

    z1 = jnp.zeros((1,), jnp.float32)
    z2 = jnp.zeros((2,), jnp.float32)
    h_t = h[:U]
    h_tm1 = jnp.concatenate([z1, h[:U - 1]])
    h_tm2 = jnp.concatenate([z2, h[:U - 2]])
    h_tp1 = h[1:U + 1]

    g = b0n * h_t + b1n * h_tm1 + b2n * h_tm2           # full biquad IR, (U,)
    c = jnp.stack([
        b1n * h_t + b2n * h_tm1,                        # weight of x[-1]
        b2n * h_t,                                      # weight of x[-2]
        h_tp1,                                          # weight of y[-1]
        -a2n * h_t,                                     # weight of y[-2]
    ]).astype(jnp.float32)                              # (4, U)

    kk = jnp.arange(U)[:, None]
    tt = jnp.arange(U)[None, :]
    dd = tt - kk
    gt = jnp.where(dd >= 0, g[jnp.clip(dd, 0, U - 1)], 0.0).astype(jnp.float32)  # (U, U)

    # --- pad input to full tiles (rows = flattened leading dims, lanes = time) --
    xf = x.reshape(-1, T).astype(jnp.float32)
    xp = jnp.pad(xf, ((0, R_pad - R0), (0, T_pad - T)))

    grid = (R_pad // R_tile, T_pad // U)

    out = pl.pallas_call(
        _biquad_block_kernel,
        out_shape=jax.ShapeDtypeStruct((R_pad, T_pad), jnp.float32),
        grid_spec=pltpu.PrefetchScalarGridSpec(
            num_scalar_prefetch=0,
            grid=grid,
            in_specs=[
                pl.BlockSpec((R_tile, U), lambda r, s: (r, s)),   # x tile
                pl.BlockSpec((U, U), lambda r, s: (0, 0)),        # Gt (resident)
                pl.BlockSpec((4, U), lambda r, s: (0, 0)),        # boundary weights
            ],
            out_specs=pl.BlockSpec((R_tile, U), lambda r, s: (r, s)),
            scratch_shapes=[
                pltpu.VMEM((R_tile, 2), jnp.float32),             # x carry
                pltpu.VMEM((R_tile, 2), jnp.float32),             # y carry (unclamped)
            ],
        ),
        compiler_params=pltpu.CompilerParams(
            dimension_semantics=("parallel", "arbitrary"),
        ),
    )(xp, gt, c)

    y = out[:R0, :T].reshape(orig_shape)
    return y.astype(dtype_in)


def _reference(x, params, sample_rate):
    """Pure-JAX reference (sequential lax.scan biquad, torchaudio semantics)."""
    center_freq = params["center_freq"][0].astype(jnp.float32)
    gain_db = params["q"][0].astype(jnp.float32)
    Q = jnp.clip(params["gain"], 0.1, 10.0)[0].astype(jnp.float32)
    w0 = 2.0 * math.pi * center_freq / sample_rate
    A = jnp.exp(gain_db / 40.0 * math.log(10.0))
    alpha = jnp.sin(w0) / 2.0 / Q
    b = jnp.stack([1.0 + alpha * A, -2.0 * jnp.cos(w0), 1.0 - alpha * A])
    a = jnp.stack([1.0 + alpha / A, -2.0 * jnp.cos(w0), 1.0 - alpha / A])
    b = b / a[0]
    a = a / a[0]
    T = x.shape[-1]
    xf = x.reshape(-1, T).astype(jnp.float32)

    def step(carry, xt):
        x1, x2, y1, y2 = carry
        yt = b[0] * xt + b[1] * x1 + b[2] * x2 - a[1] * y1 - a[2] * y2
        return (xt, x1, yt, y1), yt

    z = jnp.zeros((xf.shape[0],), jnp.float32)
    _, ys = lax.scan(step, (z, z, z, z), xf.T)
    return jnp.clip(ys.T, -1.0, 1.0).reshape(x.shape)


if __name__ == "__main__":
    sample_rate = 16000

    # Deterministic parameters (shapes (1,), matching the module's nn.Parameters).
    params = {
        "center_freq": jnp.array([2000.0], jnp.float32),
        "q": jnp.array([3.0], jnp.float32),       # used as gain_db by equalizer_biquad
        "gain": jnp.array([0.9], jnp.float32),    # clamped, used as Q
    }

    key = jax.random.PRNGKey(0)
    # Small audio batch: (batch, channels, time). T=800 exercises multiple time
    # tiles (U=256) plus row/time padding, so the cross-tile carry path is tested.
    B, C, T = 2, 4, 800
    x = 0.5 * jax.random.normal(key, (B, C, T), dtype=jnp.float32)
    t = jnp.zeros(())  # unused, as in the torch module

    y = biquad_eq_forward(x, t, params, sample_rate)
    y = jax.block_until_ready(y)

    y_ref = _reference(x, params, sample_rate)
    assert y.shape == x.shape and y.dtype == x.dtype
    assert jnp.allclose(y, y_ref, atol=1e-4, rtol=1e-4)

    print("KERNEL_OK")
</pallas_src>

<mosaic_0001>
module attributes {stable_mosaic.version = 11 : i64} {
  func.func @_biquad_block_kernel(%arg0: i32, %arg1: i32, %arg2: memref<8x256xf32, #tpu.memory_space<vmem>>, %arg3: memref<256x256xf32, #tpu.memory_space<vmem>>, %arg4: memref<4x256xf32, #tpu.memory_space<vmem>>, %arg5: memref<8x256xf32, #tpu.memory_space<vmem>>, %arg6: memref<8x2xf32, #tpu.memory_space<vmem>>, %arg7: memref<8x2xf32, #tpu.memory_space<vmem>>) attributes {dimension_semantics = [#tpu.dimension_semantics<parallel>, #tpu.dimension_semantics<arbitrary>], iteration_bounds = array<i64: 1, 4>, scalar_prefetch = 0 : i64, scratch_operands = 2 : i64, tpu.core_type = #tpu.core_type<tc>, window_params = [{transform_indices = @transform_0, window_bounds = array<i64: 8, 256>}, {pipeline_mode = #tpu.pipeline_mode<synchronous>, transform_indices = @transform_1, window_bounds = array<i64: 256, 256>}, {pipeline_mode = #tpu.pipeline_mode<synchronous>, transform_indices = @transform_2, window_bounds = array<i64: 4, 256>}, {transform_indices = @transform_3, window_bounds = array<i64: 8, 256>}]} {
    %c0_i32 = arith.constant 0 : i32
    %0 = arith.cmpi eq, %arg1, %c0_i32 : i32
    %1 = arith.extui %0 : i1 to i32
    %c0_i32_0 = arith.constant 0 : i32
    %2 = arith.cmpi ne, %1, %c0_i32_0 : i32
    scf.if %2 {
      %cst_25 = arith.constant 0.000000e+00 : f32
      %39 = vector.broadcast %cst_25 : f32 to vector<8x2xf32>
      %c0_26 = arith.constant 0 : index
      %c0_27 = arith.constant 0 : index
      %40 = vector.load %arg6[%c0_26, %c0_27] : memref<8x2xf32, #tpu.memory_space<vmem>>, vector<8x2xf32>
      tpu.vector_store %arg6[%c0_26, %c0_27], %39 {strides = array<i32>} : memref<8x2xf32, #tpu.memory_space<vmem>>, vector<8x2xf32>,
      %cst_28 = arith.constant 0.000000e+00 : f32
      %41 = vector.broadcast %cst_28 : f32 to vector<8x2xf32>
      %c0_29 = arith.constant 0 : index
      %c0_30 = arith.constant 0 : index
      %42 = vector.load %arg7[%c0_29, %c0_30] : memref<8x2xf32, #tpu.memory_space<vmem>>, vector<8x2xf32>
      tpu.vector_store %arg7[%c0_29, %c0_30], %41 {strides = array<i32>} : memref<8x2xf32, #tpu.memory_space<vmem>>, vector<8x2xf32>,
    } else {
    }
    %c0 = arith.constant 0 : index
    %c0_1 = arith.constant 0 : index
    %3 = vector.load %arg2[%c0, %c0_1] : memref<8x256xf32, #tpu.memory_space<vmem>>, vector<8x256xf32>
    %c0_2 = arith.constant 0 : index
    %c0_3 = arith.constant 0 : index
    %4 = vector.load %arg3[%c0_2, %c0_3] : memref<256x256xf32, #tpu.memory_space<vmem>>, vector<256x256xf32>
    %cst = arith.constant dense<0.000000e+00> : vector<8x256xf32>
    %5 = tpu.matmul %3, %4, %cst {dimension_numbers = #tpu.dot_dimension_numbers<[1], [0], [0], [1], [0, 0, 1, 1], [], []>, precision = #tpu.contract_precision<fp32>} : vector<8x256xf32>, vector<256x256xf32>, vector<8x256xf32> -> vector<8x256xf32>
    %c0_4 = arith.constant 0 : index
    %c1 = arith.constant 1 : index
    %6 = vector.load %arg6[%c0_4, %c1] : memref<8x2xf32, #tpu.memory_space<vmem>>, vector<8x1xf32>
    %c0_5 = arith.constant 0 : index
    %c0_6 = arith.constant 0 : index
    %7 = vector.load %arg4[%c0_5, %c0_6] : memref<4x256xf32, #tpu.memory_space<vmem>>, vector<1x256xf32>
    %8 = vector.broadcast %6 : vector<8x1xf32> to vector<8x256xf32>
    %9 = vector.broadcast %7 : vector<1x256xf32> to vector<8x256xf32>
    %10 = arith.mulf %8, %9 : vector<8x256xf32>
    %11 = arith.addf %5, %10 : vector<8x256xf32>
    %c0_7 = arith.constant 0 : index
    %c0_8 = arith.constant 0 : index
    %12 = vector.load %arg6[%c0_7, %c0_8] : memref<8x2xf32, #tpu.memory_space<vmem>>, vector<8x1xf32>
    %c1_9 = arith.constant 1 : index
    %c0_10 = arith.constant 0 : index
    %13 = vector.load %arg4[%c1_9, %c0_10] : memref<4x256xf32, #tpu.memory_space<vmem>>, vector<1x256xf32>
    %14 = vector.broadcast %12 : vector<8x1xf32> to vector<8x256xf32>
    %15 = vector.broadcast %13 : vector<1x256xf32> to vector<8x256xf32>
    %16 = arith.mulf %14, %15 : vector<8x256xf32>
    %17 = arith.addf %11, %16 : vector<8x256xf32>
    %c0_11 = arith.constant 0 : index
    %c1_12 = arith.constant 1 : index
    %18 = vector.load %arg7[%c0_11, %c1_12] : memref<8x2xf32, #tpu.memory_space<vmem>>, vector<8x1xf32>
    %c2 = arith.constant 2 : index
    %c0_13 = arith.constant 0 : index
    %19 = vector.load %arg4[%c2, %c0_13] : memref<4x256xf32, #tpu.memory_space<vmem>>, vector<1x256xf32>
    %20 = vector.broadcast %18 : vector<8x1xf32> to vector<8x256xf32>
    %21 = vector.broadcast %19 : vector<1x256xf32> to vector<8x256xf32>
    %22 = arith.mulf %20, %21 : vector<8x256xf32>
    %23 = arith.addf %17, %22 : vector<8x256xf32>
    %c0_14 = arith.constant 0 : index
    %c0_15 = arith.constant 0 : index
    %24 = vector.load %arg7[%c0_14, %c0_15] : memref<8x2xf32, #tpu.memory_space<vmem>>, vector<8x1xf32>
    %c3 = arith.constant 3 : index
    %c0_16 = arith.constant 0 : index
    %25 = vector.load %arg4[%c3, %c0_16] : memref<4x256xf32, #tpu.memory_space<vmem>>, vector<1x256xf32>
    %26 = vector.broadcast %24 : vector<8x1xf32> to vector<8x256xf32>
    %27 = vector.broadcast %25 : vector<1x256xf32> to vector<8x256xf32>
    %28 = arith.mulf %26, %27 : vector<8x256xf32>
    %29 = arith.addf %23, %28 : vector<8x256xf32>
    %30 = vector.extract_strided_slice %3 {offsets = [0, 254], sizes = [8, 2], strides = [1, 1]} : vector<8x256xf32> to vector<8x2xf32>
    %c0_17 = arith.constant 0 : index
    %c0_18 = arith.constant 0 : index
    %31 = vector.load %arg6[%c0_17, %c0_18] : memref<8x2xf32, #tpu.memory_space<vmem>>, vector<8x2xf32>
    tpu.vector_store %arg6[%c0_17, %c0_18], %30 {strides = array<i32>} : memref<8x2xf32, #tpu.memory_space<vmem>>, vector<8x2xf32>,
    %32 = vector.extract_strided_slice %29 {offsets = [0, 254], sizes = [8, 2], strides = [1, 1]} : vector<8x256xf32> to vector<8x2xf32>
    %c0_19 = arith.constant 0 : index
    %c0_20 = arith.constant 0 : index
    %33 = vector.load %arg7[%c0_19, %c0_20] : memref<8x2xf32, #tpu.memory_space<vmem>>, vector<8x2xf32>
    tpu.vector_store %arg7[%c0_19, %c0_20], %32 {strides = array<i32>} : memref<8x2xf32, #tpu.memory_space<vmem>>, vector<8x2xf32>,
    %cst_21 = arith.constant -1.000000e+00 : f32
    %cst_22 = arith.constant 1.000000e+00 : f32
    %34 = vector.broadcast %cst_21 : f32 to vector<8x256xf32>
    %35 = arith.maximumf %34, %29 : vector<8x256xf32>
    %36 = vector.broadcast %cst_22 : f32 to vector<8x256xf32>
    %37 = arith.minimumf %36, %35 : vector<8x256xf32>
    %c0_23 = arith.constant 0 : index
    %c0_24 = arith.constant 0 : index
    %38 = vector.load %arg5[%c0_23, %c0_24] : memref<8x256xf32, #tpu.memory_space<vmem>>, vector<8x256xf32>
    tpu.vector_store %arg5[%c0_23, %c0_24], %37 {strides = array<i32>} : memref<8x256xf32, #tpu.memory_space<vmem>>, vector<8x256xf32>,
    return
  }
  func.func @transform_0(%arg0: i32, %arg1: i32) -> (i32, i32) {
    %c0_i32 = arith.constant 0 : i32
    return %arg0, %arg1 : i32, i32
  }
  func.func @transform_1(%arg0: i32, %arg1: i32) -> (i32, i32) {
    %c0_i32 = arith.constant 0 : i32
    %c0_i32_0 = arith.constant 0 : i32
    %c0_i32_1 = arith.constant 0 : i32
    return %c0_i32, %c0_i32_0 : i32, i32
  }
  func.func @transform_2(%arg0: i32, %arg1: i32) -> (i32, i32) {
    %c0_i32 = arith.constant 0 : i32
    %c0_i32_0 = arith.constant 0 : i32
    %c0_i32_1 = arith.constant 0 : i32
    return %c0_i32, %c0_i32_0 : i32, i32
  }
  func.func @transform_3(%arg0: i32, %arg1: i32) -> (i32, i32) {
    %c0_i32 = arith.constant 0 : i32
    return %arg0, %arg1 : i32, i32
  }
}

</mosaic_0001>

<llo_original>
// kernel: tpu_custom_call.1
$region0: #{tpu_custom_call.1}
  #allocation0 [shape = 'u32[]', space=smem, size = 0x4, offset = 0x4, fixed_abs, tag = 'smem constant byte address 0x4 - core index']
  #allocation1 [shape = 'u32[144,128]{1,0:T(1,128)}', space=vmem, size = 0x12000, scoped, tag = 'internal scratch']
  #allocation2 [shape = 'f32[8,2]{1,0:T(8,128)}', space=vmem, size = 0x1000, scoped, tag = 'scratch operand']
  #allocation3 [shape = 'f32[8,2]{1,0:T(8,128)}', space=vmem, size = 0x1000, scoped, tag = 'scratch operand']
  %s0 = inlined_call_operand.hbm [shape: f32[8,1024], index: 0, kind: input, shape index: {}]
  %s1 = inlined_call_operand.hbm [shape: f32[256,256], index: 1, kind: input, shape index: {}]
  %s2 = inlined_call_operand.hbm [shape: f32[4,256], index: 2, kind: input, shape index: {}]
  %s3 = inlined_call_operand.hbm [shape: f32[8,1024], index: 3, kind: output, shape index: {}]
  %s4 = sld [smem:[#allocation0]]
  $region61: #{tpu_custom_call.1} parent=0
    _
  %s6 = ssub.s32 1, %s4
  %s7 = scalar_select 0, %s6, %s4
  $region1: #{tpu_custom_call.1} parent=0
    #allocation4 [shape = 'u8[16384]{0}', space=vmem, size = 0x4000, scoped, tag = 'input window, operand 0']
    #allocation5 [shape = 's32[2]{0}', space=sflag, size = 0x8, scoped, tag = 'scoped memory for tpu_custom_call.1']
    #allocation6 [shape = 's32[2]{0}', space=sflag, size = 0x8, scoped, tag = 'scoped memory for tpu_custom_call.1']
    #allocation7 [shape = 'u8[262144]{0}', space=vmem, size = 0x40000, scoped, tag = 'input window, operand 1, single buffered']
    #allocation8 [shape = 's32[1]{0}', space=sflag, size = 0x4, scoped, tag = 'scoped memory for tpu_custom_call.1']
    #allocation9 [shape = 'u8[4096]{0}', space=vmem, size = 0x1000, scoped, tag = 'input window, operand 2, single buffered']
    #allocation10 [shape = 'u8[16384]{0}', space=vmem, size = 0x4000, scoped, tag = 'output window, operand 0']
    %8 = vsyncpa [#allocation5], 0
    %s9 = scalar_lea.sflag [#allocation5], 1
    %10 = vsyncpa %s9, 0
    %11 = vsyncpa [#allocation8], 0
    %12 = vsyncpa [#allocation6], 0
    %s13 = scalar_lea.sflag [#allocation6], 1
    %14 = vsyncpa %s13, 0
    loop: start=0, step=1, limit=6
    $region2: #{tpu_custom_call.1} parent=1 // loop_pre_header
      _
    $region3: #{tpu_custom_call.1} parent=1 // loop_header
      %s16 = sphi 0, %s20
      %p17 = scmp.ge.s32.totalorder %s16, 6
      %s23 = sphi 0, %s35
      %s24 = sphi 0, %s31
      %s25 = sphi 0, %s23
      %s26 = sphi 0, %s24
      %s27 = sphi 0, %s25
      %s28 = sphi 0, %s26
      %s40 = sphi 0, %s42
      %s43 = sphi 0, %s40
      %s44 = sphi 0, %s43
      %s60 = sphi 0, %s44
      %s64 = sphi 0, %s64
      %s66 = sphi 0, %s64
      %s67 = sphi 0, %s66
      %s81 = sphi 0, %s67
      %s85 = sphi 0, %s85
      %s87 = sphi 0, %s85
      %s88 = sphi 0, %s87
      %s102 = sphi 0, %s88
      %s110 = sphi 0, %s112
      %s113 = sphi 0, %s110
      %s114 = sphi 0, %s113
      %s130 = sphi 0, %s114
    $region4: #{tpu_custom_call.1} parent=1 // loop_header_branch
      %19 = sbr.rel (%p17) target = $region8
    $region5: #{tpu_custom_call.1} parent=1 // loop_body
      %s21 = ssub.s32 %s16, 1
      %s22 = ssub.s32 %s16, 2
      %s29 = sadd.s32 1, %s24
      %p30 = scmp.ge.s32.totalorder %s29, 4
      %s31 = scalar_select %p30, 0, %s29
      %s32 = sadd.s32 1, %s23
      %s33 = scalar_select %p30, %s32, %s23
      %p34 = scmp.ge.s32.totalorder %s33, 1
      %s35 = scalar_select %p34, 0, %s33
      %s36 = ssub.s32 %s23, %s35
      %s37 = ssub.s32 %s24, %s31
      %s38 = sor.u32 %s36, %s37
      %p39 = scmp.eq.s32.totalorder %s38, 0
      %s41 = sadd.s32 %s40, 1
      %s42 = scalar_select %p39, %s40, %s41
      %p45 = pneg %p39
      %p46 = scmp.eq.s32.totalorder %s16, 3
      %p47 = por %p45, %p46
      %p48 = scmp.ne.s32.totalorder %s40, %s43
      %p49 = scmp.eq.s32.totalorder %s16, 0
      %p50 = por %p48, %p49
      %p51 = scmp.ne.s32.totalorder %s40, %s43
      %p52 = scmp.eq.s32.totalorder %s21, 3
      %p53 = por %p51, %p52
      %p54 = scmp.ne.s32.totalorder %s43, %s44
      %p55 = scmp.eq.s32.totalorder %s21, 0
      %p56 = por %p54, %p55
      %p57 = scmp.ne.s32.totalorder %s43, %s44
      %p58 = scmp.eq.s32.totalorder %s22, 3
      %p59 = por %p57, %p58
      %p61 = scmp.ne.s32.totalorder %s44, %s60
      %p62 = scmp.eq.s32.totalorder %s22, 0
      %p63 = por %p61, %p62
      %s65 = sadd.s32 %s64, 1
      %p68 = scmp.eq.s32.totalorder %s16, 3
      %p69 = scmp.ne.s32.totalorder %s64, %s66
      %p70 = scmp.eq.s32.totalorder %s16, 0
      %p71 = por %p69, %p70
      %p72 = scmp.ne.s32.totalorder %s64, %s66
      %p73 = scmp.eq.s32.totalorder %s21, 3
      %p74 = por %p72, %p73
      %p75 = scmp.ne.s32.totalorder %s66, %s67
      %p76 = scmp.eq.s32.totalorder %s21, 0
      %p77 = por %p75, %p76
      %p78 = scmp.ne.s32.totalorder %s66, %s67
      %p79 = scmp.eq.s32.totalorder %s22, 3
      %p80 = por %p78, %p79
      %p82 = scmp.ne.s32.totalorder %s67, %s81
      %p83 = scmp.eq.s32.totalorder %s22, 0
      %p84 = por %p82, %p83
      %s86 = sadd.s32 %s85, 1
      %p89 = scmp.eq.s32.totalorder %s16, 3
      %p90 = scmp.ne.s32.totalorder %s85, %s87
      %p91 = scmp.eq.s32.totalorder %s16, 0
      %p92 = por %p90, %p91
      %p93 = scmp.ne.s32.totalorder %s85, %s87
      %p94 = scmp.eq.s32.totalorder %s21, 3
      %p95 = por %p93, %p94
      %p96 = scmp.ne.s32.totalorder %s87, %s88
      %p97 = scmp.eq.s32.totalorder %s21, 0
      %p98 = por %p96, %p97
      %p99 = scmp.ne.s32.totalorder %s87, %s88
      %p100 = scmp.eq.s32.totalorder %s22, 3
      %p101 = por %p99, %p100
      %p103 = scmp.ne.s32.totalorder %s88, %s102
      %p104 = scmp.eq.s32.totalorder %s22, 0
      %p105 = por %p103, %p104
      %s106 = ssub.s32 %s23, %s35
      %s107 = ssub.s32 %s24, %s31
      %s108 = sor.u32 %s106, %s107
      %p109 = scmp.eq.s32.totalorder %s108, 0
      %s111 = sadd.s32 %s110, 1
      %s112 = scalar_select %p109, %s110, %s111
      %p115 = pneg %p109
      %p116 = scmp.eq.s32.totalorder %s16, 3
      %p117 = por %p115, %p116
      %p118 = scmp.ne.s32.totalorder %s110, %s113
      %p119 = scmp.eq.s32.totalorder %s16, 0
      %p120 = por %p118, %p119
      %p121 = scmp.ne.s32.totalorder %s110, %s113
      %p122 = scmp.eq.s32.totalorder %s21, 3
      %p123 = por %p121, %p122
      %p124 = scmp.ne.s32.totalorder %s113, %s114
      %p125 = scmp.eq.s32.totalorder %s21, 0
      %p126 = por %p124, %p125
      %p127 = scmp.ne.s32.totalorder %s113, %s114
      %p128 = scmp.eq.s32.totalorder %s22, 3
      %p129 = por %p127, %p128
      %p131 = scmp.ne.s32.totalorder %s114, %s130
      %p132 = scmp.eq.s32.totalorder %s22, 0
      %p133 = por %p131, %p132
      %p134 = scmp.le.s32.totalorder 1, %s16
      %p135 = scmp.lt.s32.totalorder %s16, 5
      %p136 = pnand %p134, %p135
      %p137 = pneg %p136
      // Predicated region
      $region9: #{tpu_custom_call.1} parent=5 // pred_check
        _
      $region10: #{tpu_custom_call.1} parent=5 // pred_check_branch
        %139 = sbr.rel (%p136) target = $region12
      $region11: #{tpu_custom_call.1} parent=5 // pred_region
        %s140 = ssub.s32 %s16, 1
        // Predicated region
        $region13: #{tpu_custom_call.1} parent=11 // pred_check
          %p141 = pneg %p77
        $region14: #{tpu_custom_call.1} parent=11 // pred_check_branch
          %143 = sbr.rel (%p141) target = $region16
        $region15: #{tpu_custom_call.1} parent=11 // pred_region
          %s145 = ssub.s32 8192, 8192
          %146 = vsyncadd [#allocation8], %s145
          %s147 = sshll.u32 [#allocation7], 4
          %s148 = int_to_ptr.vmem [resolvable:$true] %s147
          %153 = dma.hbm_to_vmem [thread:$0]  %s1, 8192, %s148, [#allocation8], 256, 256, 16
        $region16: #{tpu_custom_call.1} parent=11 // pred_fallthru
          _
        // Predicated region
        $region17: #{tpu_custom_call.1} parent=11 // pred_check
          %p154 = pneg %p98
        $region18: #{tpu_custom_call.1} parent=11 // pred_check_branch
          %156 = sbr.rel (%p154) target = $region20
        $region19: #{tpu_custom_call.1} parent=11 // pred_region
          %s158 = ssub.s32 128, 128
          %159 = vsyncadd [#allocation8], %s158
          %s161 = sshll.u32 [#allocation9], 4
          %s162 = int_to_ptr.vmem [resolvable:$true] %s161
          %164 = dma.hbm_to_vmem [thread:$0]  %s2, 128, %s162, [#allocation8]
        $region20: #{tpu_custom_call.1} parent=11 // pred_fallthru
          _
      $region12: #{tpu_custom_call.1} parent=5 // pred_fallthru
        _
      %p165 = scmp.lt.s32.totalorder %s16, 4
      // Predicated region
      $region21: #{tpu_custom_call.1} parent=5 // pred_check
        %p166 = pneg %p165
      $region22: #{tpu_custom_call.1} parent=5 // pred_check_branch
        %168 = sbr.rel (%p166) target = $region24
      $region23: #{tpu_custom_call.1} parent=5 // pred_region
        // Predicated region
        $region25: #{tpu_custom_call.1} parent=23 // pred_check
          %p169 = pneg %p50
        $region26: #{tpu_custom_call.1} parent=23 // pred_check_branch
          %171 = sbr.rel (%p169) target = $region28
        $region27: #{tpu_custom_call.1} parent=23 // pred_region
          %s172 = sand.u32 %s40, 1
          %s173 = scalar_lea.sflag [#allocation5], %s172
          %s174 = sand.u32 %s40, 1
          %s175 = smul.addr %s174, 16
          %s176 = scalar_lea.vmem [#allocation4], %s175
          %s177 = smul.u32 2, %s24
          %s179 = ssub.s32 256, 256
          %180 = vsyncadd %s173, %s179
          %s181 = smul.addr %s23, 8
          %s182 = sadd.s32 %s177, %s181
          %s183 = smul.addr %s182, 128
          %s184 = scalar_lea.hbm %s0, %s183
          %s186 = sshll.u32 %s176, 4
          %s187 = int_to_ptr.vmem [resolvable:$true] %s186
          %189 = dma.hbm_to_vmem [thread:$0]  %s184, 256, %s187, %s173
        $region28: #{tpu_custom_call.1} parent=23 // pred_fallthru
          _
      $region24: #{tpu_custom_call.1} parent=5 // pred_fallthru
        _
      %p190 = scmp.le.s32.totalorder 1, %s16
      %p191 = scmp.lt.s32.totalorder %s16, 5
      %p192 = pnand %p190, %p191
      %p193 = pneg %p192
      // Predicated region
      $region29: #{tpu_custom_call.1} parent=5 // pred_check
        _
      $region30: #{tpu_custom_call.1} parent=5 // pred_check_branch
        %195 = sbr.rel (%p192) target = $region32
      $region31: #{tpu_custom_call.1} parent=5 // pred_region
        %s196 = ssub.s32 %s16, 1
        %s197 = sand.u32 %s43, 1
        %s198 = scalar_lea.sflag [#allocation5], %s197
        %s199 = sand.u32 %s43, 1
        %s200 = smul.addr %s199, 16
        %s201 = scalar_lea.vmem [#allocation4], %s200
        // Predicated region
        $region33: #{tpu_custom_call.1} parent=31 // pred_check
          %p202 = pneg %p56
        $region34: #{tpu_custom_call.1} parent=31 // pred_check_branch
          %204 = sbr.rel (%p202) target = $region36
        $region35: #{tpu_custom_call.1} parent=31 // pred_region
          %205 = dma.done %s198, 256
        $region36: #{tpu_custom_call.1} parent=31 // pred_fallthru
          _
        // Predicated region
        $region37: #{tpu_custom_call.1} parent=31 // pred_check
          %p206 = pneg %p77
        $region38: #{tpu_custom_call.1} parent=31 // pred_check_branch
          %208 = sbr.rel (%p206) target = $region40
        $region39: #{tpu_custom_call.1} parent=31 // pred_region
          %209 = dma.done [#allocation8], 8192
        $region40: #{tpu_custom_call.1} parent=31 // pred_fallthru
          _
        // Predicated region
        $region41: #{tpu_custom_call.1} parent=31 // pred_check
          %p210 = pneg %p98
        $region42: #{tpu_custom_call.1} parent=31 // pred_check_branch
          %212 = sbr.rel (%p210) target = $region44
        $region43: #{tpu_custom_call.1} parent=31 // pred_region
          %213 = dma.done [#allocation8], 128
        $region44: #{tpu_custom_call.1} parent=31 // pred_fallthru
          _
        %s214 = sand.u32 %s43, 1
        %s215 = scalar_lea.sflag [#allocation5], %s214
        %s216 = sand.u32 %s43, 1
        %s217 = smul.addr %s216, 16
        %s218 = scalar_lea.vmem [#allocation4], %s217
        %p219 = pneg %p56
        %p220 = pneg %p53
        %p221 = pneg %p77
        %p222 = pneg %p74
        %p223 = pneg %p98
        %p224 = pneg %p95
        %p225 = pneg %p126
        %p226 = pneg %p123
        %s227 = sand.u32 %s113, 1
        %s228 = scalar_lea.sflag [#allocation6], %s227
        %s229 = sand.u32 %s113, 1
        %s230 = smul.addr %s229, 16
        %s231 = scalar_lea.vmem [#allocation10], %s230
        %s232 = smul.u32 2, %s26
        %s233 = smul.u32 2, %s26
        %p234 = scmp.eq.s32.totalorder %s26, 0
        // Predicated region
        $region45: #{tpu_custom_call.1} parent=31 // pred_check
          %p235 = pneg %p234
        $region46: #{tpu_custom_call.1} parent=31 // pred_check_branch
          %237 = sbr.rel (%p235) target = $region48
        $region47: #{tpu_custom_call.1} parent=31 // pred_region
          %vm238 = vcmask 15360
          %239 = vst.msk [vmem:[#allocation2] sm:$0xff] %vm238, 0.0
          %240 = vst.msk [vmem:[#allocation3] sm:$0xff] %vm238, 0.0
        $region48: #{tpu_custom_call.1} parent=31 // pred_fallthru
          _
        %v241 = vld [vmem:[%s201] sm:$0xff]
        %v242 = vld [vmem:[%s201 + $0x8] sm:$0xff]
        %v243 = vld [vmem:[#allocation7] sm:$0xff]
        %v244 = vld [vmem:[#allocation7 + $0x8] sm:$0xff]
        %v245 = vld [vmem:[#allocation7 + $0x10] sm:$0xff]
        %v246 = vld [vmem:[#allocation7 + $0x18] sm:$0xff]
        %v247 = vld [vmem:[#allocation7 + $0x20] sm:$0xff]
        %v248 = vld [vmem:[#allocation7 + $0x28] sm:$0xff]
        %v249 = vld [vmem:[#allocation7 + $0x30] sm:$0xff]
        %v250 = vld [vmem:[#allocation7 + $0x38] sm:$0xff]
        %v251 = vld [vmem:[#allocation7 + $0x40] sm:$0xff]
        %v252 = vld [vmem:[#allocation7 + $0x48] sm:$0xff]
        %v253 = vld [vmem:[#allocation7 + $0x50] sm:$0xff]
        %v254 = vld [vmem:[#allocation7 + $0x58] sm:$0xff]
        %v255 = vld [vmem:[#allocation7 + $0x60] sm:$0xff]
        %v256 = vld [vmem:[#allocation7 + $0x68] sm:$0xff]
        %v257 = vld [vmem:[#allocation7 + $0x70] sm:$0xff]
        %v258 = vld [vmem:[#allocation7 + $0x78] sm:$0xff]
        %v259 = vld [vmem:[#allocation7 + $0x80] sm:$0xff]
        %v260 = vld [vmem:[#allocation7 + $0x88] sm:$0xff]
        %v261 = vld [vmem:[#allocation7 + $0x90] sm:$0xff]
        %v262 = vld [vmem:[#allocation7 + $0x98] sm:$0xff]
        %v263 = vld [vmem:[#allocation7 + $0xa0] sm:$0xff]
        %v264 = vld [vmem:[#allocation7 + $0xa8] sm:$0xff]
        %v265 = vld [vmem:[#allocation7 + $0xb0] sm:$0xff]
        %v266 = vld [vmem:[#allocation7 + $0xb8] sm:$0xff]
        %v267 = vld [vmem:[#allocation7 + $0xc0] sm:$0xff]
        %v268 = vld [vmem:[#allocation7 + $0xc8] sm:$0xff]
        %v269 = vld [vmem:[#allocation7 + $0xd0] sm:$0xff]
        %v270 = vld [vmem:[#allocation7 + $0xd8] sm:$0xff]
        %v271 = vld [vmem:[#allocation7 + $0xe0] sm:$0xff]
        %v272 = vld [vmem:[#allocation7 + $0xe8] sm:$0xff]
        %v273 = vld [vmem:[#allocation7 + $0xf0] sm:$0xff]
        %v274 = vld [vmem:[#allocation7 + $0xf8] sm:$0xff]
        %v275 = vld [vmem:[#allocation7 + $0x100] sm:$0xff]
        %v276 = vld [vmem:[#allocation7 + $0x108] sm:$0xff]
        %v277 = vld [vmem:[#allocation7 + $0x110] sm:$0xff]
        %v278 = vld [vmem:[#allocation7 + $0x118] sm:$0xff]
        %v279 = vld [vmem:[#allocation7 + $0x120] sm:$0xff]
        %v280 = vld [vmem:[#allocation7 + $0x128] sm:$0xff]
        %v281 = vld [vmem:[#allocation7 + $0x130] sm:$0xff]
        %v282 = vld [vmem:[#allocation7 + $0x138] sm:$0xff]
        %v283 = vld [vmem:[#allocation7 + $0x140] sm:$0xff]
        %v284 = vld [vmem:[#allocation7 + $0x148] sm:$0xff]
        %v285 = vld [vmem:[#allocation7 + $0x150] sm:$0xff]
        %v286 = vld [vmem:[#allocation7 + $0x158] sm:$0xff]
        %v287 = vld [vmem:[#allocation7 + $0x160] sm:$0xff]
        %v288 = vld [vmem:[#allocation7 + $0x168] sm:$0xff]
        %v289 = vld [vmem:[#allocation7 + $0x170] sm:$0xff]
        %v290 = vld [vmem:[#allocation7 + $0x178] sm:$0xff]
        %v291 = vld [vmem:[#allocation7 + $0x180] sm:$0xff]
        %v292 = vld [vmem:[#allocation7 + $0x188] sm:$0xff]
        %v293 = vld [vmem:[#allocation7 + $0x190] sm:$0xff]
        %v294 = vld [vmem:[#allocation7 + $0x198] sm:$0xff]
        %v295 = vld [vmem:[#allocation7 + $0x1a0] sm:$0xff]
        %v296 = vld [vmem:[#allocation7 + $0x1a8] sm:$0xff]
        %v297 = vld [vmem:[#allocation7 + $0x1b0] sm:$0xff]
        %v298 = vld [vmem:[#allocation7 + $0x1b8] sm:$0xff]
        %v299 = vld [vmem:[#allocation7 + $0x1c0] sm:$0xff]
        %v300 = vld [vmem:[#allocation7 + $0x1c8] sm:$0xff]
        %v301 = vld [vmem:[#allocation7 + $0x1d0] sm:$0xff]
        %v302 = vld [vmem:[#allocation7 + $0x1d8] sm:$0xff]
        %v303 = vld [vmem:[#allocation7 + $0x1e0] sm:$0xff]
        %v304 = vld [vmem:[#allocation7 + $0x1e8] sm:$0xff]
        %v305 = vld [vmem:[#allocation7 + $0x1f0] sm:$0xff]
        %v306 = vld [vmem:[#allocation7 + $0x1f8] sm:$0xff]
        %v307 = vld [vmem:[#allocation2] sm:$0xff]
        %v308 = vld [vmem:[#allocation9] ss:$4 sm:$0x3]
        %310 = vset.pattern.permute.xlu0 1
        %311 = vperm.xlu0 %310, %v307
        %v312 = vpop.permute.xlu0 %311
        %v315 = vlaneseq
        %v316 = vshrl.u32 %v315, 7
        %v317 = vsub.s32 0, %v316
        %v318 = vrot.slane %v308, %v317
        %v319 = vlaneseq
        %v320 = vshrl.u32 %v319, 7
        %v321 = vsub.s32 1, %v320
        %v322 = vrot.slane %v308, %v321
        %v325 = vmul.f32 %v312, %v318
        %v326 = vmul.f32 %v312, %v322
        %v327 = vand.u32 %v274, 4294901760
        %328 = vmatprep.subr.mxu0 %v327
        %v329 = vand.u32 %v273, 4294901760
        %330 = vmatpush1.msra.mxu0 %v329
        %v331 = vand.u32 %v272, 4294901760
        %332 = vmatprep.subr.mxu0 %v331
        %v333 = vand.u32 %v271, 4294901760
        %334 = vmatpush1.msra.mxu0 %v333
        %v335 = vand.u32 %v270, 4294901760
        %336 = vmatprep.subr.mxu0 %v335
        %v337 = vand.u32 %v269, 4294901760
        %338 = vmatpush1.msra.mxu0 %v337
        %v339 = vand.u32 %v268, 4294901760
        %340 = vmatprep.subr.mxu0 %v339
        %v341 = vand.u32 %v267, 4294901760
        %342 = vmatpush1.msra.mxu0 %v341
        %v343 = vand.u32 %v266, 4294901760
        %344 = vmatprep.subr.mxu0 %v343
        %v345 = vand.u32 %v265, 4294901760
        %346 = vmatpush1.msra.mxu0 %v345
        %v347 = vand.u32 %v264, 4294901760
        %348 = vmatprep.subr.mxu0 %v347
        %v349 = vand.u32 %v263, 4294901760
        %350 = vmatpush1.msra.mxu0 %v349
        %v351 = vand.u32 %v262, 4294901760
        %352 = vmatprep.subr.mxu0 %v351
        %v353 = vand.u32 %v261, 4294901760
        %354 = vmatpush1.msra.mxu0 %v353
        %v355 = vand.u32 %v260, 4294901760
        %356 = vmatprep.subr.mxu0 %v355
        %v357 = vand.u32 %v259, 4294901760
        %358 = vmatpush1.msra.mxu0 %v357
        %v359 = vand.u32 %v258, 4294901760
        %360 = vmatprep.subr.mxu0 %v359
        %v361 = vand.u32 %v257, 4294901760
        %362 = vmatpush1.msra.mxu0 %v361
        %v363 = vand.u32 %v256, 4294901760
        %364 = vmatprep.subr.mxu0 %v363
        %v365 = vand.u32 %v255, 4294901760
        %366 = vmatpush1.msra.mxu0 %v365
        %v367 = vand.u32 %v254, 4294901760
        %368 = vmatprep.subr.mxu0 %v367
        %v369 = vand.u32 %v253, 4294901760
        %370 = vmatpush1.msra.mxu0 %v369
        %v371 = vand.u32 %v252, 4294901760
        %372 = vmatprep.subr.mxu0 %v371
        %v373 = vand.u32 %v251, 4294901760
        %374 = vmatpush1.msra.mxu0 %v373
        %v375 = vand.u32 %v250, 4294901760
        %376 = vmatprep.subr.mxu0 %v375
        %v377 = vand.u32 %v249, 4294901760
        %378 = vmatpush1.msra.mxu0 %v377
        %v379 = vand.u32 %v248, 4294901760
        %380 = vmatprep.subr.mxu0 %v379
        %v381 = vand.u32 %v247, 4294901760
        %382 = vmatpush1.msra.mxu0 %v381
        %v383 = vand.u32 %v246, 4294901760
        %384 = vmatprep.subr.mxu0 %v383
        %v385 = vand.u32 %v245, 4294901760
        %386 = vmatpush1.msra.mxu0 %v385
        %v387 = vand.u32 %v244, 4294901760
        %388 = vmatprep.subr.mxu0 %v387
        %v389 = vand.u32 %v243, 4294901760
        %390 = vmatpush1.msra.mxu0 %v389
        %v391 = vand.u32 %v306, 4294901760
        %392 = vmatprep.subr.mxu0 %v391
        %v393 = vand.u32 %v305, 4294901760
        %394 = vmatpush2.msra.mxu0 %v393
        %v395 = vand.u32 %v304, 4294901760
        %396 = vmatprep.subr.mxu0 %v395
        %v397 = vand.u32 %v303, 4294901760
        %398 = vmatpush2.msra.mxu0 %v397
        %v399 = vand.u32 %v302, 4294901760
        %400 = vmatprep.subr.mxu0 %v399
        %v401 = vand.u32 %v301, 4294901760
        %402 = vmatpush2.msra.mxu0 %v401
        %v403 = vand.u32 %v300, 4294901760
        %404 = vmatprep.subr.mxu0 %v403
        %v405 = vand.u32 %v299, 4294901760
        %406 = vmatpush2.msra.mxu0 %v405
        %v407 = vand.u32 %v298, 4294901760
        %408 = vmatprep.subr.mxu0 %v407
        %v409 = vand.u32 %v297, 4294901760
        %410 = vmatpush2.msra.mxu0 %v409
        %v411 = vand.u32 %v296, 4294901760
        %412 = vmatprep.subr.mxu0 %v411
        %v413 = vand.u32 %v295, 4294901760
        %414 = vmatpush2.msra.mxu0 %v413
        %v415 = vand.u32 %v294, 4294901760
        %416 = vmatprep.subr.mxu0 %v415
        %v417 = vand.u32 %v293, 4294901760
        %418 = vmatpush2.msra.mxu0 %v417
        %v419 = vand.u32 %v292, 4294901760
        %420 = vmatprep.subr.mxu0 %v419
        %v421 = vand.u32 %v291, 4294901760
        %422 = vmatpush2.msra.mxu0 %v421
        %v423 = vand.u32 %v290, 4294901760
        %424 = vmatprep.subr.mxu0 %v423
        %v425 = vand.u32 %v289, 4294901760
        %426 = vmatpush2.msra.mxu0 %v425
        %v427 = vand.u32 %v288, 4294901760
        %428 = vmatprep.subr.mxu0 %v427
        %v429 = vand.u32 %v287, 4294901760
        %430 = vmatpush2.msra.mxu0 %v429
        %v431 = vand.u32 %v286, 4294901760
        %432 = vmatprep.subr.mxu0 %v431
        %v433 = vand.u32 %v285, 4294901760
        %434 = vmatpush2.msra.mxu0 %v433
        %v435 = vand.u32 %v284, 4294901760
        %436 = vmatprep.subr.mxu0 %v435
        %v437 = vand.u32 %v283, 4294901760
        %438 = vmatpush2.msra.mxu0 %v437
        %v439 = vand.u32 %v282, 4294901760
        %440 = vmatprep.subr.mxu0 %v439
        %v441 = vand.u32 %v281, 4294901760
        %442 = vmatpush2.msra.mxu0 %v441
        %v443 = vand.u32 %v280, 4294901760
        %444 = vmatprep.subr.mxu0 %v443
        %v445 = vand.u32 %v279, 4294901760
        %446 = vmatpush2.msra.mxu0 %v445
        %v447 = vand.u32 %v278, 4294901760
        %448 = vmatprep.subr.mxu0 %v447
        %v449 = vand.u32 %v277, 4294901760
        %450 = vmatpush2.msra.mxu0 %v449
        %v451 = vand.u32 %v276, 4294901760
        %452 = vmatprep.subr.mxu0 %v451
        %v453 = vand.u32 %v275, 4294901760
        %454 = vmatpush2.msra.mxu0 %v453
        %v455 = vand.u32 %v242, 4294901760
        %v456 = vsub.f32 %v242, %v455
        %v457 = vand.u32 %v456, 4294901760
        %v458 = vsub.f32 %v456, %v457
        %v459 = vand.u32 %v458, 4294901760
        %460 = vmatprep.mubr.f32.mxu0 %v459
        %v461 = vand.u32 %v241, 4294901760
        %v462 = vsub.f32 %v241, %v461
        %v463 = vand.u32 %v462, 4294901760
        %v464 = vsub.f32 %v462, %v463
        %v465 = vand.u32 %v464, 4294901760
        %466 = vmatmul.mubr.f32.gmra.mxu0 %v465
        %v467 = vpop.f32.mrf.mxu0
        %v468 = vadd.f32 %v325, %v467
        %v469 = vpop.f32.mrf.mxu0
        %v470 = vadd.f32 %v326, %v469
        %471 = vdwg.mxu0
        %v472 = vand.u32 %v274, 4294901760
        %v473 = vsub.f32 %v274, %v472
        %v474 = vand.u32 %v473, 4294901760
        %v475 = vsub.f32 %v473, %v474
        %v476 = vand.u32 %v475, 4294901760
        %477 = vmatprep.subr.mxu0 %v476
        %v478 = vand.u32 %v273, 4294901760
        %v479 = vsub.f32 %v273, %v478
        %v480 = vand.u32 %v479, 4294901760
        %v481 = vsub.f32 %v479, %v480
        %v482 = vand.u32 %v481, 4294901760
        %483 = vmatpush1.msra.mxu0 %v482
        %v484 = vand.u32 %v272, 4294901760
        %v485 = vsub.f32 %v272, %v484
        %v486 = vand.u32 %v485, 4294901760
        %v487 = vsub.f32 %v485, %v486
        %v488 = vand.u32 %v487, 4294901760
        %489 = vmatprep.subr.mxu0 %v488
        %v490 = vand.u32 %v271, 4294901760
        %v491 = vsub.f32 %v271, %v490
        %v492 = vand.u32 %v491, 4294901760
        %v493 = vsub.f32 %v491, %v492
        %v494 = vand.u32 %v493, 4294901760
        %495 = vmatpush1.msra.mxu0 %v494
        %v496 = vand.u32 %v270, 4294901760
        %v497 = vsub.f32 %v270, %v496
        %v498 = vand.u32 %v497, 4294901760
        %v499 = vsub.f32 %v497, %v498
        %v500 = vand.u32 %v499, 4294901760
        %501 = vmatprep.subr.mxu0 %v500
        %v502 = vand.u32 %v269, 4294901760
        %v503 = vsub.f32 %v269, %v502
        %v504 = vand.u32 %v503, 4294901760
        %v505 = vsub.f32 %v503, %v504
        %v506 = vand.u32 %v505, 4294901760
        %507 = vmatpush1.msra.mxu0 %v506
        %v508 = vand.u32 %v268, 4294901760
        %v509 = vsub.f32 %v268, %v508
        %v510 = vand.u32 %v509, 4294901760
        %v511 = vsub.f32 %v509, %v510
        %v512 = vand.u32 %v511, 4294901760
        %513 = vmatprep.subr.mxu0 %v512
        %v514 = vand.u32 %v267, 4294901760
        %v515 = vsub.f32 %v267, %v514
        %v516 = vand.u32 %v515, 4294901760
        %v517 = vsub.f32 %v515, %v516
        %v518 = vand.u32 %v517, 4294901760
        %519 = vmatpush1.msra.mxu0 %v518
        %v520 = vand.u32 %v266, 4294901760
        %v521 = vsub.f32 %v266, %v520
        %v522 = vand.u32 %v521, 4294901760
        %v523 = vsub.f32 %v521, %v522
        %v524 = vand.u32 %v523, 4294901760
        %525 = vmatprep.subr.mxu0 %v524
        %v526 = vand.u32 %v265, 4294901760
        %v527 = vsub.f32 %v265, %v526
        %v528 = vand.u32 %v527, 4294901760
        %v529 = vsub.f32 %v527, %v528
        %v530 = vand.u32 %v529, 4294901760
        %531 = vmatpush1.msra.mxu0 %v530
        %v532 = vand.u32 %v264, 4294901760
        %v533 = vsub.f32 %v264, %v532
        %v534 = vand.u32 %v533, 4294901760
        %v535 = vsub.f32 %v533, %v534
        %v536 = vand.u32 %v535, 4294901760
        %537 = vmatprep.subr.mxu0 %v536
        %v538 = vand.u32 %v263, 4294901760
        %v539 = vsub.f32 %v263, %v538
        %v540 = vand.u32 %v539, 4294901760
        %v541 = vsub.f32 %v539, %v540
        %v542 = vand.u32 %v541, 4294901760
        %543 = vmatpush1.msra.mxu0 %v542
        %v544 = vand.u32 %v262, 4294901760
        %v545 = vsub.f32 %v262, %v544
        %v546 = vand.u32 %v545, 4294901760
        %v547 = vsub.f32 %v545, %v546
        %v548 = vand.u32 %v547, 4294901760
        %549 = vmatprep.subr.mxu0 %v548
        %v550 = vand.u32 %v261, 4294901760
        %v551 = vsub.f32 %v261, %v550
        %v552 = vand.u32 %v551, 4294901760
        %v553 = vsub.f32 %v551, %v552
        %v554 = vand.u32 %v553, 4294901760
        %555 = vmatpush1.msra.mxu0 %v554
        %v556 = vand.u32 %v260, 4294901760
        %v557 = vsub.f32 %v260, %v556
        %v558 = vand.u32 %v557, 4294901760
        %v559 = vsub.f32 %v557, %v558
        %v560 = vand.u32 %v559, 4294901760
        %561 = vmatprep.subr.mxu0 %v560
        %v562 = vand.u32 %v259, 4294901760
        %v563 = vsub.f32 %v259, %v562
        %v564 = vand.u32 %v563, 4294901760
        %v565 = vsub.f32 %v563, %v564
        %v566 = vand.u32 %v565, 4294901760
        %567 = vmatpush1.msra.mxu0 %v566
        %v568 = vand.u32 %v258, 4294901760
        %v569 = vsub.f32 %v258, %v568
        %v570 = vand.u32 %v569, 4294901760
        %v571 = vsub.f32 %v569, %v570
        %v572 = vand.u32 %v571, 4294901760
        %573 = vmatprep.subr.mxu0 %v572
        %v574 = vand.u32 %v257, 4294901760
        %v575 = vsub.f32 %v257, %v574
        %v576 = vand.u32 %v575, 4294901760
        %v577 = vsub.f32 %v575, %v576
        %v578 = vand.u32 %v577, 4294901760
        %579 = vmatpush1.msra.mxu0 %v578
        %v580 = vand.u32 %v256, 4294901760
        %v581 = vsub.f32 %v256, %v580
        %v582 = vand.u32 %v581, 4294901760
        %v583 = vsub.f32 %v581, %v582
        %v584 = vand.u32 %v583, 4294901760
        %585 = vmatprep.subr.mxu0 %v584
        %v586 = vand.u32 %v255, 4294901760
        %v587 = vsub.f32 %v255, %v586
        %v588 = vand.u32 %v587, 4294901760
        %v589 = vsub.f32 %v587, %v588
        %v590 = vand.u32 %v589, 4294901760
        %591 = vmatpush1.msra.mxu0 %v590
        %v592 = vand.u32 %v254, 4294901760
        %v593 = vsub.f32 %v254, %v592
        %v594 = vand.u32 %v593, 4294901760
        %v595 = vsub.f32 %v593, %v594
        %v596 = vand.u32 %v595, 4294901760
        %597 = vmatprep.subr.mxu0 %v596
        %v598 = vand.u32 %v253, 4294901760
        %v599 = vsub.f32 %v253, %v598
        %v600 = vand.u32 %v599, 4294901760
        %v601 = vsub.f32 %v599, %v600
        %v602 = vand.u32 %v601, 4294901760
        %603 = vmatpush1.msra.mxu0 %v602
        %v604 = vand.u32 %v252, 4294901760
        %v605 = vsub.f32 %v252, %v604
        %v606 = vand.u32 %v605, 4294901760
        %v607 = vsub.f32 %v605, %v606
        %v608 = vand.u32 %v607, 4294901760
        %609 = vmatprep.subr.mxu0 %v608
        %v610 = vand.u32 %v251, 4294901760
        %v611 = vsub.f32 %v251, %v610
        %v612 = vand.u32 %v611, 4294901760
        %v613 = vsub.f32 %v611, %v612
        %v614 = vand.u32 %v613, 4294901760
        %615 = vmatpush1.msra.mxu0 %v614
        %v616 = vand.u32 %v250, 4294901760
        %v617 = vsub.f32 %v250, %v616
        %v618 = vand.u32 %v617, 4294901760
        %v619 = vsub.f32 %v617, %v618
        %v620 = vand.u32 %v619, 4294901760
        %621 = vmatprep.subr.mxu0 %v620
        %v622 = vand.u32 %v249, 4294901760
        %v623 = vsub.f32 %v249, %v622
        %v624 = vand.u32 %v623, 4294901760
        %v625 = vsub.f32 %v623, %v624
        %v626 = vand.u32 %v625, 4294901760
        %627 = vmatpush1.msra.mxu0 %v626
        %v628 = vand.u32 %v248, 4294901760
        %v629 = vsub.f32 %v248, %v628
        %v630 = vand.u32 %v629, 4294901760
        %v631 = vsub.f32 %v629, %v630
        %v632 = vand.u32 %v631, 4294901760
        %633 = vmatprep.subr.mxu0 %v632
        %v634 = vand.u32 %v247, 4294901760
        %v635 = vsub.f32 %v247, %v634
        %v636 = vand.u32 %v635, 4294901760
        %v637 = vsub.f32 %v635, %v636
        %v638 = vand.u32 %v637, 4294901760
        %639 = vmatpush1.msra.mxu0 %v638
        %v640 = vand.u32 %v246, 4294901760
        %v641 = vsub.f32 %v246, %v640
        %v642 = vand.u32 %v641, 4294901760
        %v643 = vsub.f32 %v641, %v642
        %v644 = vand.u32 %v643, 4294901760
        %645 = vmatprep.subr.mxu0 %v644
        %v646 = vand.u32 %v245, 4294901760
        %v647 = vsub.f32 %v245, %v646
        %v648 = vand.u32 %v647, 4294901760
        %v649 = vsub.f32 %v647, %v648
        %v650 = vand.u32 %v649, 4294901760
        %651 = vmatpush1.msra.mxu0 %v650
        %v652 = vand.u32 %v244, 4294901760
        %v653 = vsub.f32 %v244, %v652
        %v654 = vand.u32 %v653, 4294901760
        %v655 = vsub.f32 %v653, %v654
        %v656 = vand.u32 %v655, 4294901760
        %657 = vmatprep.subr.mxu0 %v656
        %v658 = vand.u32 %v243, 4294901760
        %v659 = vsub.f32 %v243, %v658
        %v660 = vand.u32 %v659, 4294901760
        %v661 = vsub.f32 %v659, %v660
        %v662 = vand.u32 %v661, 4294901760
        %663 = vmatpush1.msra.mxu0 %v662
        %v664 = vand.u32 %v306, 4294901760
        %v665 = vsub.f32 %v306, %v664
        %v666 = vand.u32 %v665, 4294901760
        %v667 = vsub.f32 %v665, %v666
        %v668 = vand.u32 %v667, 4294901760
        %669 = vmatprep.subr.mxu0 %v668
        %v670 = vand.u32 %v305, 4294901760
        %v671 = vsub.f32 %v305, %v670
        %v672 = vand.u32 %v671, 4294901760
        %v673 = vsub.f32 %v671, %v672
        %v674 = vand.u32 %v673, 4294901760
        %675 = vmatpush2.msra.mxu0 %v674
        %v676 = vand.u32 %v304, 4294901760
        %v677 = vsub.f32 %v304, %v676
        %v678 = vand.u32 %v677, 4294901760
        %v679 = vsub.f32 %v677, %v678
        %v680 = vand.u32 %v679, 4294901760
        %681 = vmatprep.subr.mxu0 %v680
        %v682 = vand.u32 %v303, 4294901760
        %v683 = vsub.f32 %v303, %v682
        %v684 = vand.u32 %v683, 4294901760
        %v685 = vsub.f32 %v683, %v684
        %v686 = vand.u32 %v685, 4294901760
        %687 = vmatpush2.msra.mxu0 %v686
        %v688 = vand.u32 %v302, 4294901760
        %v689 = vsub.f32 %v302, %v688
        %v690 = vand.u32 %v689, 4294901760
        %v691 = vsub.f32 %v689, %v690
        %v692 = vand.u32 %v691, 4294901760
        %693 = vmatprep.subr.mxu0 %v692
        %v694 = vand.u32 %v301, 4294901760
        %v695 = vsub.f32 %v301, %v694
        %v696 = vand.u32 %v695, 4294901760
        %v697 = vsub.f32 %v695, %v696
        %v698 = vand.u32 %v697, 4294901760
        %699 = vmatpush2.msra.mxu0 %v698
        %v700 = vand.u32 %v300, 4294901760
        %v701 = vsub.f32 %v300, %v700
        %v702 = vand.u32 %v701, 4294901760
        %v703 = vsub.f32 %v701, %v702
        %v704 = vand.u32 %v703, 4294901760
        %705 = vmatprep.subr.mxu0 %v704
        %v706 = vand.u32 %v299, 4294901760
        %v707 = vsub.f32 %v299, %v706
        %v708 = vand.u32 %v707, 4294901760
        %v709 = vsub.f32 %v707, %v708
        %v710 = vand.u32 %v709, 4294901760
        %711 = vmatpush2.msra.mxu0 %v710
        %v712 = vand.u32 %v298, 4294901760
        %v713 = vsub.f32 %v298, %v712
        %v714 = vand.u32 %v713, 4294901760
        %v715 = vsub.f32 %v713, %v714
        %v716 = vand.u32 %v715, 4294901760
        %717 = vmatprep.subr.mxu0 %v716
        %v718 = vand.u32 %v297, 4294901760
        %v719 = vsub.f32 %v297, %v718
        %v720 = vand.u32 %v719, 4294901760
        %v721 = vsub.f32 %v719, %v720
        %v722 = vand.u32 %v721, 4294901760
        %723 = vmatpush2.msra.mxu0 %v722
        %v724 = vand.u32 %v296, 4294901760
        %v725 = vsub.f32 %v296, %v724
        %v726 = vand.u32 %v725, 4294901760
        %v727 = vsub.f32 %v725, %v726
        %v728 = vand.u32 %v727, 4294901760
        %729 = vmatprep.subr.mxu0 %v728
        %v730 = vand.u32 %v295, 4294901760
        %v731 = vsub.f32 %v295, %v730
        %v732 = vand.u32 %v731, 4294901760
        %v733 = vsub.f32 %v731, %v732
        %v734 = vand.u32 %v733, 4294901760
        %735 = vmatpush2.msra.mxu0 %v734
        %v736 = vand.u32 %v294, 4294901760
        %v737 = vsub.f32 %v294, %v736
        %v738 = vand.u32 %v737, 4294901760
        %v739 = vsub.f32 %v737, %v738
        %v740 = vand.u32 %v739, 4294901760
        %741 = vmatprep.subr.mxu0 %v740
        %v742 = vand.u32 %v293, 4294901760
        %v743 = vsub.f32 %v293, %v742
        %v744 = vand.u32 %v743, 4294901760
        %v745 = vsub.f32 %v743, %v744
        %v746 = vand.u32 %v745, 4294901760
        %747 = vmatpush2.msra.mxu0 %v746
        %v748 = vand.u32 %v292, 4294901760
        %v749 = vsub.f32 %v292, %v748
        %v750 = vand.u32 %v749, 4294901760
        %v751 = vsub.f32 %v749, %v750
        %v752 = vand.u32 %v751, 4294901760
        %753 = vmatprep.subr.mxu0 %v752
        %v754 = vand.u32 %v291, 4294901760
        %v755 = vsub.f32 %v291, %v754
        %v756 = vand.u32 %v755, 4294901760
        %v757 = vsub.f32 %v755, %v756
        %v758 = vand.u32 %v757, 4294901760
        %759 = vmatpush2.msra.mxu0 %v758
        %v760 = vand.u32 %v290, 4294901760
        %v761 = vsub.f32 %v290, %v760
        %v762 = vand.u32 %v761, 4294901760
        %v763 = vsub.f32 %v761, %v762
        %v764 = vand.u32 %v763, 4294901760
        %765 = vmatprep.subr.mxu0 %v764
        %v766 = vand.u32 %v289, 4294901760
        %v767 = vsub.f32 %v289, %v766
        %v768 = vand.u32 %v767, 4294901760
        %v769 = vsub.f32 %v767, %v768
        %v770 = vand.u32 %v769, 4294901760
        %771 = vmatpush2.msra.mxu0 %v770
        %v772 = vand.u32 %v288, 4294901760
        %v773 = vsub.f32 %v288, %v772
        %v774 = vand.u32 %v773, 4294901760
        %v775 = vsub.f32 %v773, %v774
        %v776 = vand.u32 %v775, 4294901760
        %777 = vmatprep.subr.mxu0 %v776
        %v778 = vand.u32 %v287, 4294901760
        %v779 = vsub.f32 %v287, %v778
        %v780 = vand.u32 %v779, 4294901760
        %v781 = vsub.f32 %v779, %v780
        %v782 = vand.u32 %v781, 4294901760
        %783 = vmatpush2.msra.mxu0 %v782
        %v784 = vand.u32 %v286, 4294901760
        %v785 = vsub.f32 %v286, %v784
        %v786 = vand.u32 %v785, 4294901760
        %v787 = vsub.f32 %v785, %v786
        %v788 = vand.u32 %v787, 4294901760
        %789 = vmatprep.subr.mxu0 %v788
        %v790 = vand.u32 %v285, 4294901760
        %v791 = vsub.f32 %v285, %v790
        %v792 = vand.u32 %v791, 4294901760
        %v793 = vsub.f32 %v791, %v792
        %v794 = vand.u32 %v793, 4294901760
        %795 = vmatpush2.msra.mxu0 %v794
        %v796 = vand.u32 %v284, 4294901760
        %v797 = vsub.f32 %v284, %v796
        %v798 = vand.u32 %v797, 4294901760
        %v799 = vsub.f32 %v797, %v798
        %v800 = vand.u32 %v799, 4294901760
        %801 = vmatprep.subr.mxu0 %v800
        %v802 = vand.u32 %v283, 4294901760
        %v803 = vsub.f32 %v283, %v802
        %v804 = vand.u32 %v803, 4294901760
        %v805 = vsub.f32 %v803, %v804
        %v806 = vand.u32 %v805, 4294901760
        %807 = vmatpush2.msra.mxu0 %v806
        %v808 = vand.u32 %v282, 4294901760
        %v809 = vsub.f32 %v282, %v808
        %v810 = vand.u32 %v809, 4294901760
        %v811 = vsub.f32 %v809, %v810
        %v812 = vand.u32 %v811, 4294901760
        %813 = vmatprep.subr.mxu0 %v812
        %v814 = vand.u32 %v281, 4294901760
        %v815 = vsub.f32 %v281, %v814
        %v816 = vand.u32 %v815, 4294901760
        %v817 = vsub.f32 %v815, %v816
        %v818 = vand.u32 %v817, 4294901760
        %819 = vmatpush2.msra.mxu0 %v818
        %v820 = vand.u32 %v280, 4294901760
        %v821 = vsub.f32 %v280, %v820
        %v822 = vand.u32 %v821, 4294901760
        %v823 = vsub.f32 %v821, %v822
        %v824 = vand.u32 %v823, 4294901760
        %825 = vmatprep.subr.mxu0 %v824
        %v826 = vand.u32 %v279, 4294901760
        %v827 = vsub.f32 %v279, %v826
        %v828 = vand.u32 %v827, 4294901760
        %v829 = vsub.f32 %v827, %v828
        %v830 = vand.u32 %v829, 4294901760
        %831 = vmatpush2.msra.mxu0 %v830
        %v832 = vand.u32 %v278, 4294901760
        %v833 = vsub.f32 %v278, %v832
        %v834 = vand.u32 %v833, 4294901760
        %v835 = vsub.f32 %v833, %v834
        %v836 = vand.u32 %v835, 4294901760
        %837 = vmatprep.subr.mxu0 %v836
        %v838 = vand.u32 %v277, 4294901760
        %v839 = vsub.f32 %v277, %v838
        %v840 = vand.u32 %v839, 4294901760
        %v841 = vsub.f32 %v839, %v840
        %v842 = vand.u32 %v841, 4294901760
        %843 = vmatpush2.msra.mxu0 %v842
        %v844 = vand.u32 %v276, 4294901760
        %v845 = vsub.f32 %v276, %v844
        %v846 = vand.u32 %v845, 4294901760
        %v847 = vsub.f32 %v845, %v846
        %v848 = vand.u32 %v847, 4294901760
        %849 = vmatprep.subr.mxu0 %v848
        %v850 = vand.u32 %v275, 4294901760
        %v851 = vsub.f32 %v275, %v850
        %v852 = vand.u32 %v851, 4294901760
        %v853 = vsub.f32 %v851, %v852
        %v854 = vand.u32 %v853, 4294901760
        %855 = vmatpush2.msra.mxu0 %v854
        %v856 = vand.u32 %v242, 4294901760
        %857 = vmatprep.mubr.f32.mxu0 %v856
        %v858 = vand.u32 %v241, 4294901760
        %859 = vmatmul.mubr.f32.gmra.mxu0 %v858
        %v860 = vpop.f32.mrf.mxu0
        %v861 = vadd.f32 %v468, %v860
        %v862 = vpop.f32.mrf.mxu0
        %v863 = vadd.f32 %v470, %v862
        %864 = vdwg.mxu0
        %v865 = vand.u32 %v274, 4294901760
        %v866 = vsub.f32 %v274, %v865
        %867 = vmatprep.subr.mxu0 %v866
        %v868 = vand.u32 %v273, 4294901760
        %v869 = vsub.f32 %v273, %v868
        %870 = vmatpush1.msra.mxu0 %v869
        %v871 = vand.u32 %v272, 4294901760
        %v872 = vsub.f32 %v272, %v871
        %873 = vmatprep.subr.mxu0 %v872
        %v874 = vand.u32 %v271, 4294901760
        %v875 = vsub.f32 %v271, %v874
        %876 = vmatpush1.msra.mxu0 %v875
        %v877 = vand.u32 %v270, 4294901760
        %v878 = vsub.f32 %v270, %v877
        %879 = vmatprep.subr.mxu0 %v878
        %v880 = vand.u32 %v269, 4294901760
        %v881 = vsub.f32 %v269, %v880
        %882 = vmatpush1.msra.mxu0 %v881
        %v883 = vand.u32 %v268, 4294901760
        %v884 = vsub.f32 %v268, %v883
        %885 = vmatprep.subr.mxu0 %v884
        %v886 = vand.u32 %v267, 4294901760
        %v887 = vsub.f32 %v267, %v886
        %888 = vmatpush1.msra.mxu0 %v887
        %v889 = vand.u32 %v266, 4294901760
        %v890 = vsub.f32 %v266, %v889
        %891 = vmatprep.subr.mxu0 %v890
        %v892 = vand.u32 %v265, 4294901760
        %v893 = vsub.f32 %v265, %v892
        %894 = vmatpush1.msra.mxu0 %v893
        %v895 = vand.u32 %v264, 4294901760
        %v896 = vsub.f32 %v264, %v895
        %897 = vmatprep.subr.mxu0 %v896
        %v898 = vand.u32 %v263, 4294901760
        %v899 = vsub.f32 %v263, %v898
        %900 = vmatpush1.msra.mxu0 %v899
        %v901 = vand.u32 %v262, 4294901760
        %v902 = vsub.f32 %v262, %v901
        %903 = vmatprep.subr.mxu0 %v902
        %v904 = vand.u32 %v261, 4294901760
        %v905 = vsub.f32 %v261, %v904
        %906 = vmatpush1.msra.mxu0 %v905
        %v907 = vand.u32 %v260, 4294901760
        %v908 = vsub.f32 %v260, %v907
        %909 = vmatprep.subr.mxu0 %v908
        %v910 = vand.u32 %v259, 4294901760
        %v911 = vsub.f32 %v259, %v910
        %912 = vmatpush1.msra.mxu0 %v911
        %v913 = vand.u32 %v258, 4294901760
        %v914 = vsub.f32 %v258, %v913
        %915 = vmatprep.subr.mxu0 %v914
        %v916 = vand.u32 %v257, 4294901760
        %v917 = vsub.f32 %v257, %v916
        %918 = vmatpush1.msra.mxu0 %v917
        %v919 = vand.u32 %v256, 4294901760
        %v920 = vsub.f32 %v256, %v919
        %921 = vmatprep.subr.mxu0 %v920
        %v922 = vand.u32 %v255, 4294901760
        %v923 = vsub.f32 %v255, %v922
        %924 = vmatpush1.msra.mxu0 %v923
        %v925 = vand.u32 %v254, 4294901760
        %v926 = vsub.f32 %v254, %v925
        %927 = vmatprep.subr.mxu0 %v926
        %v928 = vand.u32 %v253, 4294901760
        %v929 = vsub.f32 %v253, %v928
        %930 = vmatpush1.msra.mxu0 %v929
        %v931 = vand.u32 %v252, 4294901760
        %v932 = vsub.f32 %v252, %v931
        %933 = vmatprep.subr.mxu0 %v932
        %v934 = vand.u32 %v251, 4294901760
        %v935 = vsub.f32 %v251, %v934
        %936 = vmatpush1.msra.mxu0 %v935
        %v937 = vand.u32 %v250, 4294901760
        %v938 = vsub.f32 %v250, %v937
        %939 = vmatprep.subr.mxu0 %v938
        %v940 = vand.u32 %v249, 4294901760
        %v941 = vsub.f32 %v249, %v940
        %942 = vmatpush1.msra.mxu0 %v941
        %v943 = vand.u32 %v248, 4294901760
        %v944 = vsub.f32 %v248, %v943
        %945 = vmatprep.subr.mxu0 %v944
        %v946 = vand.u32 %v247, 4294901760
        %v947 = vsub.f32 %v247, %v946
        %948 = vmatpush1.msra.mxu0 %v947
        %v949 = vand.u32 %v246, 4294901760
        %v950 = vsub.f32 %v246, %v949
        %951 = vmatprep.subr.mxu0 %v950
        %v952 = vand.u32 %v245, 4294901760
        %v953 = vsub.f32 %v245, %v952
        %954 = vmatpush1.msra.mxu0 %v953
        %v955 = vand.u32 %v244, 4294901760
        %v956 = vsub.f32 %v244, %v955
        %957 = vmatprep.subr.mxu0 %v956
        %v958 = vand.u32 %v243, 4294901760
        %v959 = vsub.f32 %v243, %v958
        %960 = vmatpush1.msra.mxu0 %v959
        %v961 = vand.u32 %v306, 4294901760
        %v962 = vsub.f32 %v306, %v961
        %963 = vmatprep.subr.mxu0 %v962
        %v964 = vand.u32 %v305, 4294901760
        %v965 = vsub.f32 %v305, %v964
        %966 = vmatpush2.msra.mxu0 %v965
        %v967 = vand.u32 %v304, 4294901760
        %v968 = vsub.f32 %v304, %v967
        %969 = vmatprep.subr.mxu0 %v968
        %v970 = vand.u32 %v303, 4294901760
        %v971 = vsub.f32 %v303, %v970
        %972 = vmatpush2.msra.mxu0 %v971
        %v973 = vand.u32 %v302, 4294901760
        %v974 = vsub.f32 %v302, %v973
        %975 = vmatprep.subr.mxu0 %v974
        %v976 = vand.u32 %v301, 4294901760
        %v977 = vsub.f32 %v301, %v976
        %978 = vmatpush2.msra.mxu0 %v977
        %v979 = vand.u32 %v300, 4294901760
        %v980 = vsub.f32 %v300, %v979
        %981 = vmatprep.subr.mxu0 %v980
        %v982 = vand.u32 %v299, 4294901760
        %v983 = vsub.f32 %v299, %v982
        %984 = vmatpush2.msra.mxu0 %v983
        %v985 = vand.u32 %v298, 4294901760
        %v986 = vsub.f32 %v298, %v985
        %987 = vmatprep.subr.mxu0 %v986
        %v988 = vand.u32 %v297, 4294901760
        %v989 = vsub.f32 %v297, %v988
        %990 = vmatpush2.msra.mxu0 %v989
        %v991 = vand.u32 %v296, 4294901760
        %v992 = vsub.f32 %v296, %v991
        %993 = vmatprep.subr.mxu0 %v992
        %v994 = vand.u32 %v295, 4294901760
        %v995 = vsub.f32 %v295, %v994
        %996 = vmatpush2.msra.mxu0 %v995
        %v997 = vand.u32 %v294, 4294901760
        %v998 = vsub.f32 %v294, %v997
        %999 = vmatprep.subr.mxu0 %v998
        %v1000 = vand.u32 %v293, 4294901760
        %v1001 = vsub.f32 %v293, %v1000
        %1002 = vmatpush2.msra.mxu0 %v1001
        %v1003 = vand.u32 %v292, 4294901760
        %v1004 = vsub.f32 %v292, %v1003
        %1005 = vmatprep.subr.mxu0 %v1004
        %v1006 = vand.u32 %v291, 4294901760
        %v1007 = vsub.f32 %v291, %v1006
        %1008 = vmatpush2.msra.mxu0 %v1007
        %v1009 = vand.u32 %v290, 4294901760
        %v1010 = vsub.f32 %v290, %v1009
        %1011 = vmatprep.subr.mxu0 %v1010
        %v1012 = vand.u32 %v289, 4294901760
        %v1013 = vsub.f32 %v289, %v1012
        %1014 = vmatpush2.msra.mxu0 %v1013
        %v1015 = vand.u32 %v288, 4294901760
        %v1016 = vsub.f32 %v288, %v1015
        %1017 = vmatprep.subr.mxu0 %v1016
        %v1018 = vand.u32 %v287, 4294901760
        %v1019 = vsub.f32 %v287, %v1018
        %1020 = vmatpush2.msra.mxu0 %v1019
        %v1021 = vand.u32 %v286, 4294901760
        %v1022 = vsub.f32 %v286, %v1021
        %1023 = vmatprep.subr.mxu0 %v1022
        %v1024 = vand.u32 %v285, 4294901760
        %v1025 = vsub.f32 %v285, %v1024
        %1026 = vmatpush2.msra.mxu0 %v1025
        %v1027 = vand.u32 %v284, 4294901760
        %v1028 = vsub.f32 %v284, %v1027
        %1029 = vmatprep.subr.mxu0 %v1028
        %v1030 = vand.u32 %v283, 4294901760
        %v1031 = vsub.f32 %v283, %v1030
        %1032 = vmatpush2.msra.mxu0 %v1031
        %v1033 = vand.u32 %v282, 4294901760
        %v1034 = vsub.f32 %v282, %v1033
        %1035 = vmatprep.subr.mxu0 %v1034
        %v1036 = vand.u32 %v281, 4294901760
        %v1037 = vsub.f32 %v281, %v1036
        %1038 = vmatpush2.msra.mxu0 %v1037
        %v1039 = vand.u32 %v280, 4294901760
        %v1040 = vsub.f32 %v280, %v1039
        %1041 = vmatprep.subr.mxu0 %v1040
        %v1042 = vand.u32 %v279, 4294901760
        %v1043 = vsub.f32 %v279, %v1042
        %1044 = vmatpush2.msra.mxu0 %v1043
        %v1045 = vand.u32 %v278, 4294901760
        %v1046 = vsub.f32 %v278, %v1045
        %1047 = vmatprep.subr.mxu0 %v1046
        %v1048 = vand.u32 %v277, 4294901760
        %v1049 = vsub.f32 %v277, %v1048
        %1050 = vmatpush2.msra.mxu0 %v1049
        %v1051 = vand.u32 %v276, 4294901760
        %v1052 = vsub.f32 %v276, %v1051
        %1053 = vmatprep.subr.mxu0 %v1052
        %v1054 = vand.u32 %v275, 4294901760
        %v1055 = vsub.f32 %v275, %v1054
        %1056 = vmatpush2.msra.mxu0 %v1055
        %v1057 = vand.u32 %v242, 4294901760
        %v1058 = vsub.f32 %v242, %v1057
        %1059 = vmatprep.mubr.f32.mxu0 %v1058
        %v1060 = vand.u32 %v241, 4294901760
        %v1061 = vsub.f32 %v241, %v1060
        %1062 = vmatmul.mubr.f32.gmra.mxu0 %v1061
        %v1063 = vpop.f32.mrf.mxu0
        %v1064 = vadd.f32 %v861, %v1063
        %v1065 = vpop.f32.mrf.mxu0
        %v1066 = vadd.f32 %v863, %v1065
        %1067 = vdwg.mxu0
        %v1068 = vand.u32 %v274, 4294901760
        %1069 = vmatprep.subr.mxu0 %v1068
        %v1070 = vand.u32 %v273, 4294901760
        %1071 = vmatpush1.msra.mxu0 %v1070
        %v1072 = vand.u32 %v272, 4294901760
        %1073 = vmatprep.subr.mxu0 %v1072
        %v1074 = vand.u32 %v271, 4294901760
        %1075 = vmatpush1.msra.mxu0 %v1074
        %v1076 = vand.u32 %v270, 4294901760
        %1077 = vmatprep.subr.mxu0 %v1076
        %v1078 = vand.u32 %v269, 4294901760
        %1079 = vmatpush1.msra.mxu0 %v1078
        %v1080 = vand.u32 %v268, 4294901760
        %1081 = vmatprep.subr.mxu0 %v1080
        %v1082 = vand.u32 %v267, 4294901760
        %1083 = vmatpush1.msra.mxu0 %v1082
        %v1084 = vand.u32 %v266, 4294901760
        %1085 = vmatprep.subr.mxu0 %v1084
        %v1086 = vand.u32 %v265, 4294901760
        %1087 = vmatpush1.msra.mxu0 %v1086
        %v1088 = vand.u32 %v264, 4294901760
        %1089 = vmatprep.subr.mxu0 %v1088
        %v1090 = vand.u32 %v263, 4294901760
        %1091 = vmatpush1.msra.mxu0 %v1090
        %v1092 = vand.u32 %v262, 4294901760
        %1093 = vmatprep.subr.mxu0 %v1092
        %v1094 = vand.u32 %v261, 4294901760
        %1095 = vmatpush1.msra.mxu0 %v1094
        %v1096 = vand.u32 %v260, 4294901760
        %1097 = vmatprep.subr.mxu0 %v1096
        %v1098 = vand.u32 %v259, 4294901760
        %1099 = vmatpush1.msra.mxu0 %v1098
        %v1100 = vand.u32 %v258, 4294901760
        %1101 = vmatprep.subr.mxu0 %v1100
        %v1102 = vand.u32 %v257, 4294901760
        %1103 = vmatpush1.msra.mxu0 %v1102
        %v1104 = vand.u32 %v256, 4294901760
        %1105 = vmatprep.subr.mxu0 %v1104
        %v1106 = vand.u32 %v255, 4294901760
        %1107 = vmatpush1.msra.mxu0 %v1106
        %v1108 = vand.u32 %v254, 4294901760
        %1109 = vmatprep.subr.mxu0 %v1108
        %v1110 = vand.u32 %v253, 4294901760
        %1111 = vmatpush1.msra.mxu0 %v1110
        %v1112 = vand.u32 %v252, 4294901760
        %1113 = vmatprep.subr.mxu0 %v1112
        %v1114 = vand.u32 %v251, 4294901760
        %1115 = vmatpush1.msra.mxu0 %v1114
        %v1116 = vand.u32 %v250, 4294901760
        %1117 = vmatprep.subr.mxu0 %v1116
        %v1118 = vand.u32 %v249, 4294901760
        %1119 = vmatpush1.msra.mxu0 %v1118
        %v1120 = vand.u32 %v248, 4294901760
        %1121 = vmatprep.subr.mxu0 %v1120
        %v1122 = vand.u32 %v247, 4294901760
        %1123 = vmatpush1.msra.mxu0 %v1122
        %v1124 = vand.u32 %v246, 4294901760
        %1125 = vmatprep.subr.mxu0 %v1124
        %v1126 = vand.u32 %v245, 4294901760
        %1127 = vmatpush1.msra.mxu0 %v1126
        %v1128 = vand.u32 %v244, 4294901760
        %1129 = vmatprep.subr.mxu0 %v1128
        %v1130 = vand.u32 %v243, 4294901760
        %1131 = vmatpush1.msra.mxu0 %v1130
        %v1132 = vand.u32 %v306, 4294901760
        %1133 = vmatprep.subr.mxu0 %v1132
        %v1134 = vand.u32 %v305, 4294901760
        %1135 = vmatpush2.msra.mxu0 %v1134
        %v1136 = vand.u32 %v304, 4294901760
        %1137 = vmatprep.subr.mxu0 %v1136
        %v1138 = vand.u32 %v303, 4294901760
        %1139 = vmatpush2.msra.mxu0 %v1138
        %v1140 = vand.u32 %v302, 4294901760
        %1141 = vmatprep.subr.mxu0 %v1140
        %v1142 = vand.u32 %v301, 4294901760
        %1143 = vmatpush2.msra.mxu0 %v1142
        %v1144 = vand.u32 %v300, 4294901760
        %1145 = vmatprep.subr.mxu0 %v1144
        %v1146 = vand.u32 %v299, 4294901760
        %1147 = vmatpush2.msra.mxu0 %v1146
        %v1148 = vand.u32 %v298, 4294901760
        %1149 = vmatprep.subr.mxu0 %v1148
        %v1150 = vand.u32 %v297, 4294901760
        %1151 = vmatpush2.msra.mxu0 %v1150
        %v1152 = vand.u32 %v296, 4294901760
        %1153 = vmatprep.subr.mxu0 %v1152
        %v1154 = vand.u32 %v295, 4294901760
        %1155 = vmatpush2.msra.mxu0 %v1154
        %v1156 = vand.u32 %v294, 4294901760
        %1157 = vmatprep.subr.mxu0 %v1156
        %v1158 = vand.u32 %v293, 4294901760
        %1159 = vmatpush2.msra.mxu0 %v1158
        %v1160 = vand.u32 %v292, 4294901760
        %1161 = vmatprep.subr.mxu0 %v1160
        %v1162 = vand.u32 %v291, 4294901760
        %1163 = vmatpush2.msra.mxu0 %v1162
        %v1164 = vand.u32 %v290, 4294901760
        %1165 = vmatprep.subr.mxu0 %v1164
        %v1166 = vand.u32 %v289, 4294901760
        %1167 = vmatpush2.msra.mxu0 %v1166
        %v1168 = vand.u32 %v288, 4294901760
        %1169 = vmatprep.subr.mxu0 %v1168
        %v1170 = vand.u32 %v287, 4294901760
        %1171 = vmatpush2.msra.mxu0 %v1170
        %v1172 = vand.u32 %v286, 4294901760
        %1173 = vmatprep.subr.mxu0 %v1172
        %v1174 = vand.u32 %v285, 4294901760
        %1175 = vmatpush2.msra.mxu0 %v1174
        %v1176 = vand.u32 %v284, 4294901760
        %1177 = vmatprep.subr.mxu0 %v1176
        %v1178 = vand.u32 %v283, 4294901760
        %1179 = vmatpush2.msra.mxu0 %v1178
        %v1180 = vand.u32 %v282, 4294901760
        %1181 = vmatprep.subr.mxu0 %v1180
        %v1182 = vand.u32 %v281, 4294901760
        %1183 = vmatpush2.msra.mxu0 %v1182
        %v1184 = vand.u32 %v280, 4294901760
        %1185 = vmatprep.subr.mxu0 %v1184
        %v1186 = vand.u32 %v279, 4294901760
        %1187 = vmatpush2.msra.mxu0 %v1186
        %v1188 = vand.u32 %v278, 4294901760
        %1189 = vmatprep.subr.mxu0 %v1188
        %v1190 = vand.u32 %v277, 4294901760
        %1191 = vmatpush2.msra.mxu0 %v1190
        %v1192 = vand.u32 %v276, 4294901760
        %1193 = vmatprep.subr.mxu0 %v1192
        %v1194 = vand.u32 %v275, 4294901760
        %1195 = vmatpush2.msra.mxu0 %v1194
        %v1196 = vand.u32 %v242, 4294901760
        %v1197 = vsub.f32 %v242, %v1196
        %v1198 = vand.u32 %v1197, 4294901760
        %1199 = vmatprep.mubr.f32.mxu0 %v1198
        %v1200 = vand.u32 %v241, 4294901760
        %v1201 = vsub.f32 %v241, %v1200
        %v1202 = vand.u32 %v1201, 4294901760
        %1203 = vmatmul.mubr.f32.gmra.mxu0 %v1202
        %v1204 = vpop.f32.mrf.mxu0
        %v1205 = vadd.f32 %v1064, %v1204
        %v1206 = vpop.f32.mrf.mxu0
        %v1207 = vadd.f32 %v1066, %v1206
        %1208 = vdwg.mxu0
        %v1209 = vand.u32 %v274, 4294901760
        %v1210 = vsub.f32 %v274, %v1209
        %v1211 = vand.u32 %v1210, 4294901760
        %1212 = vmatprep.subr.mxu0 %v1211
        %v1213 = vand.u32 %v273, 4294901760
        %v1214 = vsub.f32 %v273, %v1213
        %v1215 = vand.u32 %v1214, 4294901760
        %1216 = vmatpush1.msra.mxu0 %v1215
        %v1217 = vand.u32 %v272, 4294901760
        %v1218 = vsub.f32 %v272, %v1217
        %v1219 = vand.u32 %v1218, 4294901760
        %1220 = vmatprep.subr.mxu0 %v1219
        %v1221 = vand.u32 %v271, 4294901760
        %v1222 = vsub.f32 %v271, %v1221
        %v1223 = vand.u32 %v1222, 4294901760
        %1224 = vmatpush1.msra.mxu0 %v1223
        %v1225 = vand.u32 %v270, 4294901760
        %v1226 = vsub.f32 %v270, %v1225
        %v1227 = vand.u32 %v1226, 4294901760
        %1228 = vmatprep.subr.mxu0 %v1227
        %v1229 = vand.u32 %v269, 4294901760
        %v1230 = vsub.f32 %v269, %v1229
        %v1231 = vand.u32 %v1230, 4294901760
        %1232 = vmatpush1.msra.mxu0 %v1231
        %v1233 = vand.u32 %v268, 4294901760
        %v1234 = vsub.f32 %v268, %v1233
        %v1235 = vand.u32 %v1234, 4294901760
        %1236 = vmatprep.subr.mxu0 %v1235
        %v1237 = vand.u32 %v267, 4294901760
        %v1238 = vsub.f32 %v267, %v1237
        %v1239 = vand.u32 %v1238, 4294901760
        %1240 = vmatpush1.msra.mxu0 %v1239
        %v1241 = vand.u32 %v266, 4294901760
        %v1242 = vsub.f32 %v266, %v1241
        %v1243 = vand.u32 %v1242, 4294901760
        %1244 = vmatprep.subr.mxu0 %v1243
        %v1245 = vand.u32 %v265, 4294901760
        %v1246 = vsub.f32 %v265, %v1245
        %v1247 = vand.u32 %v1246, 4294901760
        %1248 = vmatpush1.msra.mxu0 %v1247
        %v1249 = vand.u32 %v264, 4294901760
        %v1250 = vsub.f32 %v264, %v1249
        %v1251 = vand.u32 %v1250, 4294901760
        %1252 = vmatprep.subr.mxu0 %v1251
        %v1253 = vand.u32 %v263, 4294901760
        %v1254 = vsub.f32 %v263, %v1253
        %v1255 = vand.u32 %v1254, 4294901760
        %1256 = vmatpush1.msra.mxu0 %v1255
        %v1257 = vand.u32 %v262, 4294901760
        %v1258 = vsub.f32 %v262, %v1257
        %v1259 = vand.u32 %v1258, 4294901760
        %1260 = vmatprep.subr.mxu0 %v1259
        %v1261 = vand.u32 %v261, 4294901760
        %v1262 = vsub.f32 %v261, %v1261
        %v1263 = vand.u32 %v1262, 4294901760
        %1264 = vmatpush1.msra.mxu0 %v1263
        %v1265 = vand.u32 %v260, 4294901760
        %v1266 = vsub.f32 %v260, %v1265
        %v1267 = vand.u32 %v1266, 4294901760
        %1268 = vmatprep.subr.mxu0 %v1267
        %v1269 = vand.u32 %v259, 4294901760
        %v1270 = vsub.f32 %v259, %v1269
        %v1271 = vand.u32 %v1270, 4294901760
        %1272 = vmatpush1.msra.mxu0 %v1271
        %v1273 = vand.u32 %v258, 4294901760
        %v1274 = vsub.f32 %v258, %v1273
        %v1275 = vand.u32 %v1274, 4294901760
        %1276 = vmatprep.subr.mxu0 %v1275
        %v1277 = vand.u32 %v257, 4294901760
        %v1278 = vsub.f32 %v257, %v1277
        %v1279 = vand.u32 %v1278, 4294901760
        %1280 = vmatpush1.msra.mxu0 %v1279
        %v1281 = vand.u32 %v256, 4294901760
        %v1282 = vsub.f32 %v256, %v1281
        %v1283 = vand.u32 %v1282, 4294901760
        %1284 = vmatprep.subr.mxu0 %v1283
        %v1285 = vand.u32 %v255, 4294901760
        %v1286 = vsub.f32 %v255, %v1285
        %v1287 = vand.u32 %v1286, 4294901760
        %1288 = vmatpush1.msra.mxu0 %v1287
        %v1289 = vand.u32 %v254, 4294901760
        %v1290 = vsub.f32 %v254, %v1289
        %v1291 = vand.u32 %v1290, 4294901760
        %1292 = vmatprep.subr.mxu0 %v1291
        %v1293 = vand.u32 %v253, 4294901760
        %v1294 = vsub.f32 %v253, %v1293
        %v1295 = vand.u32 %v1294, 4294901760
        %1296 = vmatpush1.msra.mxu0 %v1295
        %v1297 = vand.u32 %v252, 4294901760
        %v1298 = vsub.f32 %v252, %v1297
        %v1299 = vand.u32 %v1298, 4294901760
        %1300 = vmatprep.subr.mxu0 %v1299
        %v1301 = vand.u32 %v251, 4294901760
        %v1302 = vsub.f32 %v251, %v1301
        %v1303 = vand.u32 %v1302, 4294901760
        %1304 = vmatpush1.msra.mxu0 %v1303
        %v1305 = vand.u32 %v250, 4294901760
        %v1306 = vsub.f32 %v250, %v1305
        %v1307 = vand.u32 %v1306, 4294901760
        %1308 = vmatprep.subr.mxu0 %v1307
        %v1309 = vand.u32 %v249, 4294901760
        %v1310 = vsub.f32 %v249, %v1309
        %v1311 = vand.u32 %v1310, 4294901760
        %1312 = vmatpush1.msra.mxu0 %v1311
        %v1313 = vand.u32 %v248, 4294901760
        %v1314 = vsub.f32 %v248, %v1313
        %v1315 = vand.u32 %v1314, 4294901760
        %1316 = vmatprep.subr.mxu0 %v1315
        %v1317 = vand.u32 %v247, 4294901760
        %v1318 = vsub.f32 %v247, %v1317
        %v1319 = vand.u32 %v1318, 4294901760
        %1320 = vmatpush1.msra.mxu0 %v1319
        %v1321 = vand.u32 %v246, 4294901760
        %v1322 = vsub.f32 %v246, %v1321
        %v1323 = vand.u32 %v1322, 4294901760
        %1324 = vmatprep.subr.mxu0 %v1323
        %v1325 = vand.u32 %v245, 4294901760
        %v1326 = vsub.f32 %v245, %v1325
        %v1327 = vand.u32 %v1326, 4294901760
        %1328 = vmatpush1.msra.mxu0 %v1327
        %v1329 = vand.u32 %v244, 4294901760
        %v1330 = vsub.f32 %v244, %v1329
        %v1331 = vand.u32 %v1330, 4294901760
        %1332 = vmatprep.subr.mxu0 %v1331
        %v1333 = vand.u32 %v243, 4294901760
        %v1334 = vsub.f32 %v243, %v1333
        %v1335 = vand.u32 %v1334, 4294901760
        %1336 = vmatpush1.msra.mxu0 %v1335
        %v1337 = vand.u32 %v306, 4294901760
        %v1338 = vsub.f32 %v306, %v1337
        %v1339 = vand.u32 %v1338, 4294901760
        %1340 = vmatprep.subr.mxu0 %v1339
        %v1341 = vand.u32 %v305, 4294901760
        %v1342 = vsub.f32 %v305, %v1341
        %v1343 = vand.u32 %v1342, 4294901760
        %1344 = vmatpush2.msra.mxu0 %v1343
        %v1345 = vand.u32 %v304, 4294901760
        %v1346 = vsub.f32 %v304, %v1345
        %v1347 = vand.u32 %v1346, 4294901760
        %1348 = vmatprep.subr.mxu0 %v1347
        %v1349 = vand.u32 %v303, 4294901760
        %v1350 = vsub.f32 %v303, %v1349
        %v1351 = vand.u32 %v1350, 4294901760
        %1352 = vmatpush2.msra.mxu0 %v1351
        %v1353 = vand.u32 %v302, 4294901760
        %v1354 = vsub.f32 %v302, %v1353
        %v1355 = vand.u32 %v1354, 4294901760
        %1356 = vmatprep.subr.mxu0 %v1355
        %v1357 = vand.u32 %v301, 4294901760
        %v1358 = vsub.f32 %v301, %v1357
        %v1359 = vand.u32 %v1358, 4294901760
        %1360 = vmatpush2.msra.mxu0 %v1359
        %v1361 = vand.u32 %v300, 4294901760
        %v1362 = vsub.f32 %v300, %v1361
        %v1363 = vand.u32 %v1362, 4294901760
        %1364 = vmatprep.subr.mxu0 %v1363
        %v1365 = vand.u32 %v299, 4294901760
        %v1366 = vsub.f32 %v299, %v1365
        %v1367 = vand.u32 %v1366, 4294901760
        %1368 = vmatpush2.msra.mxu0 %v1367
        %v1369 = vand.u32 %v298, 4294901760
        %v1370 = vsub.f32 %v298, %v1369
        %v1371 = vand.u32 %v1370, 4294901760
        %1372 = vmatprep.subr.mxu0 %v1371
        %v1373 = vand.u32 %v297, 4294901760
        %v1374 = vsub.f32 %v297, %v1373
        %v1375 = vand.u32 %v1374, 4294901760
        %1376 = vmatpush2.msra.mxu0 %v1375
        %v1377 = vand.u32 %v296, 4294901760
        %v1378 = vsub.f32 %v296, %v1377
        %v1379 = vand.u32 %v1378, 4294901760
        %1380 = vmatprep.subr.mxu0 %v1379
        %v1381 = vand.u32 %v295, 4294901760
        %v1382 = vsub.f32 %v295, %v1381
        %v1383 = vand.u32 %v1382, 4294901760
        %1384 = vmatpush2.msra.mxu0 %v1383
        %v1385 = vand.u32 %v294, 4294901760
        %v1386 = vsub.f32 %v294, %v1385
        %v1387 = vand.u32 %v1386, 4294901760
        %1388 = vmatprep.subr.mxu0 %v1387
        %v1389 = vand.u32 %v293, 4294901760
        %v1390 = vsub.f32 %v293, %v1389
        %v1391 = vand.u32 %v1390, 4294901760
        %1392 = vmatpush2.msra.mxu0 %v1391
        %v1393 = vand.u32 %v292, 4294901760
        %v1394 = vsub.f32 %v292, %v1393
        %v1395 = vand.u32 %v1394, 4294901760
        %1396 = vmatprep.subr.mxu0 %v1395
        %v1397 = vand.u32 %v291, 4294901760
        %v1398 = vsub.f32 %v291, %v1397
        %v1399 = vand.u32 %v1398, 4294901760
        %1400 = vmatpush2.msra.mxu0 %v1399
        %v1401 = vand.u32 %v290, 4294901760
        %v1402 = vsub.f32 %v290, %v1401
        %v1403 = vand.u32 %v1402, 4294901760
        %1404 = vmatprep.subr.mxu0 %v1403
        %v1405 = vand.u32 %v289, 4294901760
        %v1406 = vsub.f32 %v289, %v1405
        %v1407 = vand.u32 %v1406, 4294901760
        %1408 = vmatpush2.msra.mxu0 %v1407
        %v1409 = vand.u32 %v288, 4294901760
        %v1410 = vsub.f32 %v288, %v1409
        %v1411 = vand.u32 %v1410, 4294901760
        %1412 = vmatprep.subr.mxu0 %v1411
        %v1413 = vand.u32 %v287, 4294901760
        %v1414 = vsub.f32 %v287, %v1413
        %v1415 = vand.u32 %v1414, 4294901760
        %1416 = vmatpush2.msra.mxu0 %v1415
        %v1417 = vand.u32 %v286, 4294901760
        %v1418 = vsub.f32 %v286, %v1417
        %v1419 = vand.u32 %v1418, 4294901760
        %1420 = vmatprep.subr.mxu0 %v1419
        %v1421 = vand.u32 %v285, 4294901760
        %v1422 = vsub.f32 %v285, %v1421
        %v1423 = vand.u32 %v1422, 4294901760
        %1424 = vmatpush2.msra.mxu0 %v1423
        %v1425 = vand.u32 %v284, 4294901760
        %v1426 = vsub.f32 %v284, %v1425
        %v1427 = vand.u32 %v1426, 4294901760
        %1428 = vmatprep.subr.mxu0 %v1427
        %v1429 = vand.u32 %v283, 4294901760
        %v1430 = vsub.f32 %v283, %v1429
        %v1431 = vand.u32 %v1430, 4294901760
        %1432 = vmatpush2.msra.mxu0 %v1431
        %v1433 = vand.u32 %v282, 4294901760
        %v1434 = vsub.f32 %v282, %v1433
        %v1435 = vand.u32 %v1434, 4294901760
        %1436 = vmatprep.subr.mxu0 %v1435
        %v1437 = vand.u32 %v281, 4294901760
        %v1438 = vsub.f32 %v281, %v1437
        %v1439 = vand.u32 %v1438, 4294901760
        %1440 = vmatpush2.msra.mxu0 %v1439
        %v1441 = vand.u32 %v280, 4294901760
        %v1442 = vsub.f32 %v280, %v1441
        %v1443 = vand.u32 %v1442, 4294901760
        %1444 = vmatprep.subr.mxu0 %v1443
        %v1445 = vand.u32 %v279, 4294901760
        %v1446 = vsub.f32 %v279, %v1445
        %v1447 = vand.u32 %v1446, 4294901760
        %1448 = vmatpush2.msra.mxu0 %v1447
        %v1449 = vand.u32 %v278, 4294901760
        %v1450 = vsub.f32 %v278, %v1449
        %v1451 = vand.u32 %v1450, 4294901760
        %1452 = vmatprep.subr.mxu0 %v1451
        %v1453 = vand.u32 %v277, 4294901760
        %v1454 = vsub.f32 %v277, %v1453
        %v1455 = vand.u32 %v1454, 4294901760
        %1456 = vmatpush2.msra.mxu0 %v1455
        %v1457 = vand.u32 %v276, 4294901760
        %v1458 = vsub.f32 %v276, %v1457
        %v1459 = vand.u32 %v1458, 4294901760
        %1460 = vmatprep.subr.mxu0 %v1459
        %v1461 = vand.u32 %v275, 4294901760
        %v1462 = vsub.f32 %v275, %v1461
        %v1463 = vand.u32 %v1462, 4294901760
        %1464 = vmatpush2.msra.mxu0 %v1463
        %v1465 = vand.u32 %v242, 4294901760
        %1466 = vmatprep.mubr.f32.mxu0 %v1465
        %v1467 = vand.u32 %v241, 4294901760
        %1468 = vmatmul.mubr.f32.gmra.mxu0 %v1467
        %v1469 = vpop.f32.mrf.mxu0
        %v1470 = vadd.f32 %v1205, %v1469
        %v1471 = vpop.f32.mrf.mxu0
        %v1472 = vadd.f32 %v1207, %v1471
        %1473 = vdwg.mxu0
        %v1474 = vand.u32 %v274, 4294901760
        %1475 = vmatprep.subr.mxu0 %v1474
        %v1476 = vand.u32 %v273, 4294901760
        %1477 = vmatpush1.msra.mxu0 %v1476
        %v1478 = vand.u32 %v272, 4294901760
        %1479 = vmatprep.subr.mxu0 %v1478
        %v1480 = vand.u32 %v271, 4294901760
        %1481 = vmatpush1.msra.mxu0 %v1480
        %v1482 = vand.u32 %v270, 4294901760
        %1483 = vmatprep.subr.mxu0 %v1482
        %v1484 = vand.u32 %v269, 4294901760
        %1485 = vmatpush1.msra.mxu0 %v1484
        %v1486 = vand.u32 %v268, 4294901760
        %1487 = vmatprep.subr.mxu0 %v1486
        %v1488 = vand.u32 %v267, 4294901760
        %1489 = vmatpush1.msra.mxu0 %v1488
        %v1490 = vand.u32 %v266, 4294901760
        %1491 = vmatprep.subr.mxu0 %v1490
        %v1492 = vand.u32 %v265, 4294901760
        %1493 = vmatpush1.msra.mxu0 %v1492
        %v1494 = vand.u32 %v264, 4294901760
        %1495 = vmatprep.subr.mxu0 %v1494
        %v1496 = vand.u32 %v263, 4294901760
        %1497 = vmatpush1.msra.mxu0 %v1496
        %v1498 = vand.u32 %v262, 4294901760
        %1499 = vmatprep.subr.mxu0 %v1498
        %v1500 = vand.u32 %v261, 4294901760
        %1501 = vmatpush1.msra.mxu0 %v1500
        %v1502 = vand.u32 %v260, 4294901760
        %1503 = vmatprep.subr.mxu0 %v1502
        %v1504 = vand.u32 %v259, 4294901760
        %1505 = vmatpush1.msra.mxu0 %v1504
        %v1506 = vand.u32 %v258, 4294901760
        %1507 = vmatprep.subr.mxu0 %v1506
        %v1508 = vand.u32 %v257, 4294901760
        %1509 = vmatpush1.msra.mxu0 %v1508
        %v1510 = vand.u32 %v256, 4294901760
        %1511 = vmatprep.subr.mxu0 %v1510
        %v1512 = vand.u32 %v255, 4294901760
        %1513 = vmatpush1.msra.mxu0 %v1512
        %v1514 = vand.u32 %v254, 4294901760
        %1515 = vmatprep.subr.mxu0 %v1514
        %v1516 = vand.u32 %v253, 4294901760
        %1517 = vmatpush1.msra.mxu0 %v1516
        %v1518 = vand.u32 %v252, 4294901760
        %1519 = vmatprep.subr.mxu0 %v1518
        %v1520 = vand.u32 %v251, 4294901760
        %1521 = vmatpush1.msra.mxu0 %v1520
        %v1522 = vand.u32 %v250, 4294901760
        %1523 = vmatprep.subr.mxu0 %v1522
        %v1524 = vand.u32 %v249, 4294901760
        %1525 = vmatpush1.msra.mxu0 %v1524
        %v1526 = vand.u32 %v248, 4294901760
        %1527 = vmatprep.subr.mxu0 %v1526
        %v1528 = vand.u32 %v247, 4294901760
        %1529 = vmatpush1.msra.mxu0 %v1528
        %v1530 = vand.u32 %v246, 4294901760
        %1531 = vmatprep.subr.mxu0 %v1530
        %v1532 = vand.u32 %v245, 4294901760
        %1533 = vmatpush1.msra.mxu0 %v1532
        %v1534 = vand.u32 %v244, 4294901760
        %1535 = vmatprep.subr.mxu0 %v1534
        %v1536 = vand.u32 %v243, 4294901760
        %1537 = vmatpush1.msra.mxu0 %v1536
        %v1538 = vand.u32 %v306, 4294901760
        %1539 = vmatprep.subr.mxu0 %v1538
        %v1540 = vand.u32 %v305, 4294901760
        %1541 = vmatpush2.msra.mxu0 %v1540
        %v1542 = vand.u32 %v304, 4294901760
        %1543 = vmatprep.subr.mxu0 %v1542
        %v1544 = vand.u32 %v303, 4294901760
        %1545 = vmatpush2.msra.mxu0 %v1544
        %v1546 = vand.u32 %v302, 4294901760
        %1547 = vmatprep.subr.mxu0 %v1546
        %v1548 = vand.u32 %v301, 4294901760
        %1549 = vmatpush2.msra.mxu0 %v1548
        %v1550 = vand.u32 %v300, 4294901760
        %1551 = vmatprep.subr.mxu0 %v1550
        %v1552 = vand.u32 %v299, 4294901760
        %1553 = vmatpush2.msra.mxu0 %v1552
        %v1554 = vand.u32 %v298, 4294901760
        %1555 = vmatprep.subr.mxu0 %v1554
        %v1556 = vand.u32 %v297, 4294901760
        %1557 = vmatpush2.msra.mxu0 %v1556
        %v1558 = vand.u32 %v296, 4294901760
        %1559 = vmatprep.subr.mxu0 %v1558
        %v1560 = vand.u32 %v295, 4294901760
        %1561 = vmatpush2.msra.mxu0 %v1560
        %v1562 = vand.u32 %v294, 4294901760
        %1563 = vmatprep.subr.mxu0 %v1562
        %v1564 = vand.u32 %v293, 4294901760
        %1565 = vmatpush2.msra.mxu0 %v1564
        %v1566 = vand.u32 %v292, 4294901760
        %1567 = vmatprep.subr.mxu0 %v1566
        %v1568 = vand.u32 %v291, 4294901760
        %1569 = vmatpush2.msra.mxu0 %v1568
        %v1570 = vand.u32 %v290, 4294901760
        %1571 = vmatprep.subr.mxu0 %v1570
        %v1572 = vand.u32 %v289, 4294901760
        %1573 = vmatpush2.msra.mxu0 %v1572
        %v1574 = vand.u32 %v288, 4294901760
        %1575 = vmatprep.subr.mxu0 %v1574
        %v1576 = vand.u32 %v287, 4294901760
        %1577 = vmatpush2.msra.mxu0 %v1576
        %v1578 = vand.u32 %v286, 4294901760
        %1579 = vmatprep.subr.mxu0 %v1578
        %v1580 = vand.u32 %v285, 4294901760
        %1581 = vmatpush2.msra.mxu0 %v1580
        %v1582 = vand.u32 %v284, 4294901760
        %1583 = vmatprep.subr.mxu0 %v1582
        %v1584 = vand.u32 %v283, 4294901760
        %1585 = vmatpush2.msra.mxu0 %v1584
        %v1586 = vand.u32 %v282, 4294901760
        %1587 = vmatprep.subr.mxu0 %v1586
        %v1588 = vand.u32 %v281, 4294901760
        %1589 = vmatpush2.msra.mxu0 %v1588
        %v1590 = vand.u32 %v280, 4294901760
        %1591 = vmatprep.subr.mxu0 %v1590
        %v1592 = vand.u32 %v279, 4294901760
        %1593 = vmatpush2.msra.mxu0 %v1592
        %v1594 = vand.u32 %v278, 4294901760
        %1595 = vmatprep.subr.mxu0 %v1594
        %v1596 = vand.u32 %v277, 4294901760
        %1597 = vmatpush2.msra.mxu0 %v1596
        %v1598 = vand.u32 %v276, 4294901760
        %1599 = vmatprep.subr.mxu0 %v1598
        %v1600 = vand.u32 %v275, 4294901760
        %1601 = vmatpush2.msra.mxu0 %v1600
        %v1602 = vand.u32 %v242, 4294901760
        %1603 = vmatprep.mubr.f32.mxu0 %v1602
        %v1604 = vand.u32 %v241, 4294901760
        %1605 = vmatmul.mubr.f32.gmra.mxu0 %v1604
        %v1606 = vpop.f32.mrf.mxu0
        %v1607 = vadd.f32 %v1470, %v1606
        %v1608 = vpop.f32.mrf.mxu0
        %v1609 = vadd.f32 %v1472, %v1608
        %1610 = vdwg.mxu0
        %s1611 = scalar_lea.vmem [#allocation9], 1
        %v1612 = vld [vmem:[%s1611] ss:$4 sm:$0x3]
        %1613 = vset.pattern.permute.xlu0 0
        %1614 = vperm.xlu0 %1613, %v307
        %v1615 = vpop.permute.xlu0 %1614
        %v1618 = vlaneseq
        %v1619 = vshrl.u32 %v1618, 7
        %v1620 = vsub.s32 0, %v1619
        %v1621 = vrot.slane %v1612, %v1620
        %v1622 = vlaneseq
        %v1623 = vshrl.u32 %v1622, 7
        %v1624 = vsub.s32 1, %v1623
        %v1625 = vrot.slane %v1612, %v1624
        %v1628 = vmul.f32 %v1615, %v1621
        %v1629 = vmul.f32 %v1615, %v1625
        %v1630 = vadd.f32 %v1607, %v1628
        %v1631 = vadd.f32 %v1609, %v1629
        %v1632 = vld [vmem:[#allocation3] sm:$0xff]
        %s1633 = scalar_lea.vmem [#allocation9], 2
        %v1634 = vld [vmem:[%s1633] ss:$4 sm:$0x3]
        %1636 = vset.pattern.permute.xlu0 1
        %1637 = vperm.xlu0 %1636, %v1632
        %v1638 = vpop.permute.xlu0 %1637
        %v1641 = vlaneseq
        %v1642 = vshrl.u32 %v1641, 7
        %v1643 = vsub.s32 0, %v1642
        %v1644 = vrot.slane %v1634, %v1643
        %v1645 = vlaneseq
        %v1646 = vshrl.u32 %v1645, 7
        %v1647 = vsub.s32 1, %v1646
        %v1648 = vrot.slane %v1634, %v1647
        %v1651 = vmul.f32 %v1638, %v1644
        %v1652 = vmul.f32 %v1638, %v1648
        %v1653 = vadd.f32 %v1630, %v1651
        %v1654 = vadd.f32 %v1631, %v1652
        %s1655 = scalar_lea.vmem [#allocation9], 3
        %v1656 = vld [vmem:[%s1655] ss:$4 sm:$0x3]
        %1657 = vset.pattern.permute.xlu0 0
        %1658 = vperm.xlu0 %1657, %v1632
        %v1659 = vpop.permute.xlu0 %1658
        %v1662 = vlaneseq
        %v1663 = vshrl.u32 %v1662, 7
        %v1664 = vsub.s32 0, %v1663
        %v1665 = vrot.slane %v1656, %v1664
        %v1666 = vlaneseq
        %v1667 = vshrl.u32 %v1666, 7
        %v1668 = vsub.s32 1, %v1667
        %v1669 = vrot.slane %v1656, %v1668
        %v1672 = vmul.f32 %v1659, %v1665
        %v1673 = vmul.f32 %v1659, %v1669
        %v1674 = vadd.f32 %v1653, %v1672
        %v1675 = vadd.f32 %v1654, %v1673
        %1677 = vrot.lane.b32.xlu0 %v242, 2
        %v1678 = vpop.permute.xlu0 %1677
        %vm1680 = vcmask 15360
        %1681 = vst.msk [vmem:[#allocation2] sm:$0xff] %vm1680, %v1678
        %1683 = vrot.lane.b32.xlu0 %v1675, 2
        %v1684 = vpop.permute.xlu0 %1683
        %1686 = vst.msk [vmem:[#allocation3] sm:$0xff] %vm1680, %v1684
        %v1687 = vmax.f32 %v1674, -1.0
        %v1688 = vmax.f32 %v1675, -1.0
        %v1689 = vmin.f32 %v1687, 1.0
        %v1690 = vmin.f32 %v1688, 1.0
        %1691 = vst [vmem:[%s231] sm:$0xff] %v1689
        %1692 = vst [vmem:[%s231 + $0x8] sm:$0xff] %v1690
        %s1693 = sand.u32 %s113, 1
        %s1694 = scalar_lea.sflag [#allocation6], %s1693
        %s1695 = sand.u32 %s113, 1
        %s1696 = smul.addr %s1695, 16
        %s1697 = scalar_lea.vmem [#allocation10], %s1696
        // Predicated region
        $region49: #{tpu_custom_call.1} parent=31 // pred_check
          %p1698 = pneg %p123
        $region50: #{tpu_custom_call.1} parent=31 // pred_check_branch
          %1700 = sbr.rel (%p1698) target = $region52
        $region51: #{tpu_custom_call.1} parent=31 // pred_region
          %s1701 = smul.u32 2, %s26
          %s1703 = ssub.s32 256, 256
          %1704 = vsyncadd %s1694, %s1703
          %s1705 = smul.addr %s25, 8
          %s1706 = sadd.s32 %s1701, %s1705
          %s1707 = smul.addr %s1706, 128
          %s1708 = scalar_lea.hbm %s3, %s1707
          %s1710 = sshll.u32 %s1697, 4
          %s1711 = int_to_ptr.vmem [resolvable:$true] %s1710
          %1713 = dma.vmem_to_hbm [thread:$0]  %s1711, 256, %s1708, %s1694
        $region52: #{tpu_custom_call.1} parent=31 // pred_fallthru
          _
      $region32: #{tpu_custom_call.1} parent=5 // pred_fallthru
        _
      %p1714 = scmp.le.s32.totalorder 2, %s16
      // Predicated region
      $region53: #{tpu_custom_call.1} parent=5 // pred_check
        %p1715 = pneg %p1714
      $region54: #{tpu_custom_call.1} parent=5 // pred_check_branch
        %1717 = sbr.rel (%p1715) target = $region56
      $region55: #{tpu_custom_call.1} parent=5 // pred_region
        %s1718 = ssub.s32 %s16, 2
        // Predicated region
        $region57: #{tpu_custom_call.1} parent=55 // pred_check
          %p1719 = pneg %p129
        $region58: #{tpu_custom_call.1} parent=55 // pred_check_branch
          %1721 = sbr.rel (%p1719) target = $region60
        $region59: #{tpu_custom_call.1} parent=55 // pred_region
          %s1722 = sand.u32 %s114, 1
          %s1723 = scalar_lea.sflag [#allocation6], %s1722
          %s1724 = sand.u32 %s114, 1
          %s1725 = smul.addr %s1724, 16
          %s1726 = scalar_lea.vmem [#allocation10], %s1725
          %1727 = dma.done %s1723, 256
        $region60: #{tpu_custom_call.1} parent=55 // pred_fallthru
          _
      $region56: #{tpu_custom_call.1} parent=5 // pred_fallthru
        _
    $region6: #{tpu_custom_call.1} parent=1 // loop_footer
      %s20 = sadd.s32 1, %s16
    $region7: #{tpu_custom_call.1} parent=1 // loop_footer_branch
      %15 = sbr.rel target = $region3
    $region8: #{tpu_custom_call.1} parent=1 // loop_exit
      _
    %1728 = vsyncpa [#allocation5], 1
    %s1729 = scalar_lea.sflag [#allocation5], 1
    %1730 = vsyncpa %s1729, 1
    %1731 = vsyncpa [#allocation8], 1
    %1732 = vsyncpa [#allocation6], 1
    %s1733 = scalar_lea.sflag [#allocation6], 1
    %1734 = vsyncpa %s1733, 1

</llo_original>
